<compile_context>
chip_gen: v7x
topology: tpu7x:2x2x1
jax: 0.10.0
libtpu: 0.0.40
codegen_flags: <defaults>
</compile_context>

<pallas_src>
import functools

import jax
import jax.numpy as jnp
from jax import lax
from jax.experimental import pallas as pl
from jax.experimental.pallas import tpu as pltpu


def _round_up(x, m):
    return (x + m - 1) // m * m


def _pgd_l2_kernel(num_steps, step_size, epsilon,
                   x0_ref, tgt_ref, w1_ref, w1t_ref, b1_ref,
                   w2_ref, w2t_ref, b2_ref,
                   logits_ref, xadv_ref):
    x0 = x0_ref[...]                      # (BB, DP)  f32, pad cols are zero
    w1 = w1_ref[...]                      # (DP, HP)  bf16
    w1t = w1t_ref[...]                    # (HP, DP)  bf16 (pre-transposed on host)
    w2 = w2_ref[...]                      # (HP, NP)  bf16, pad cols zero
    w2t = w2t_ref[...]                    # (NP, HP)  bf16 (pre-transposed on host)
    b1 = b1_ref[...]                      # (1, HP)   f32
    b2 = b2_ref[...]                      # (1, NP)   f32, pad entries -1e30
    bb = x0.shape[0]
    np_cls = w2.shape[1]

    # One-hot mask built in-kernel from int32 targets (cheap VPU filler; no
    # (BB, NP) one-hot DMA). Hoisted out of the step loop (constant).
    tgt = tgt_ref[...]                    # (BB, 1) int32
    onehot = lax.broadcasted_iota(jnp.int32, (bb, np_cls), 1) == tgt

    def forward(x):
        # MXU operands in bf16; accumulate, bias and ReLU in f32.
        h_pre = jnp.dot(x.astype(jnp.bfloat16), w1,
                        preferred_element_type=jnp.float32) + b1
        h = jnp.maximum(h_pre, 0.0)
        logits = jnp.dot(h.astype(jnp.bfloat16), w2,
                         preferred_element_type=jnp.float32) + b2
        return h_pre, logits

    def step(_, x):
        h_pre, logits = forward(x)

        # d(sum cross_entropy)/d(logits) = softmax(logits) - onehot(targets)
        m = jnp.max(logits, axis=-1, keepdims=True)
        e = jnp.exp(logits - m)
        p = e * pl.reciprocal(jnp.sum(e, axis=-1, keepdims=True), approx=True)
        g_logits = jnp.where(onehot, p - 1.0, p)       # pad columns stay 0

        # Backprop to the input; pre-transposed weights -> plain MXU matmuls,
        # no per-step cross-lane transposes.
        g_h = jnp.dot(g_logits.astype(jnp.bfloat16), w2t,
                      preferred_element_type=jnp.float32)
        g_h = jnp.where(h_pre > 0.0, g_h, 0.0)
        g_x = jnp.dot(g_h.astype(jnp.bfloat16), w1t,
                      preferred_element_type=jnp.float32)

        # Per-sample L2 normalization of the gradient (EUP rsqrt).
        g_x = g_x * lax.rsqrt(jnp.sum(g_x * g_x, axis=-1, keepdims=True) + 1e-18)

        # Step.
        x = x + (step_size * epsilon) * g_x

        # project(x, inputs, epsilon): push dx onto the L2 sphere of radius
        # epsilon (matches the reference: always renormalizes), then clamp.
        dx = x - x0
        dx = dx * (epsilon * lax.rsqrt(jnp.sum(dx * dx, axis=-1, keepdims=True) + 1e-18))
        return jnp.clip(x0 + dx, 0.0, 1.0)

    # Fully unroll only short attacks; long PGD runs keep the loop rolled to
    # bound live ranges (the scheduler still sees the whole body).
    x = lax.fori_loop(0, num_steps, step, x0, unroll=(num_steps <= 8))

    _, final_logits = forward(x)
    logits_ref[...] = final_logits
    xadv_ref[...] = x


class AttackPGDL2:
    """JAX/Pallas port of the PyTorch AttackPGDL2 module (forward pass only)."""

    def __init__(self, params, config, mode):
        self.params = params  # (W1, b1, W2, b2) of the wrapped MLP model
        self.rand = config['random_start']          # kept for parity; unused by forward()
        self.step_size = float(config['step_size'])
        self.epsilon = float(config['epsilon'])
        self.num_steps = int(config['num_steps'])
        self.mode = mode
        assert config['loss_func'] == 'xent', 'Use cross-entropy as loss function.'

    def _model_plain(self, x_flat):
        w1, b1, w2, b2 = self.params
        h = jnp.maximum(x_flat @ w1 + b1, 0.0)
        return h @ w2 + b2

    def __call__(self, inputs, targets):
        # inputs: (B, C, H, W) float32 NCHW; targets: (B,) int32 class ids
        b, c, h, w = inputs.shape
        d = c * h * w
        x0_flat = inputs.reshape(b, d).astype(jnp.float32)

        w1, b1, w2, b2 = self.params
        hid = w1.shape[1]
        ncls = w2.shape[1]

        if not self.mode:
            return self._model_plain(x0_flat), inputs

        # ---- lane-dense padding: D, HID, NCLS -> multiples of 128 ----
        # Zero pads are mathematically inert (zero W1 rows/cols, zero W2 rows;
        # -1e30 b2 pad kills padded-class softmax mass in f32).
        d_pad = _round_up(d, 128)
        h_pad = max(128, _round_up(hid, 128))
        np_cls = max(128, _round_up(ncls, 128))

        w1_p = jnp.zeros((d_pad, h_pad), jnp.float32).at[:d, :hid].set(
            w1.astype(jnp.float32))
        b1_p = jnp.zeros((1, h_pad), jnp.float32).at[0, :hid].set(
            b1.astype(jnp.float32))
        w2_p = jnp.zeros((h_pad, np_cls), jnp.float32).at[:hid, :ncls].set(
            w2.astype(jnp.float32))
        b2_p = jnp.full((1, np_cls), -1e30, jnp.float32).at[0, :ncls].set(
            b2.astype(jnp.float32))

        # bf16 MXU operands + host-side pre-transposed copies for the backward.
        w1_bf = w1_p.astype(jnp.bfloat16)
        w1t_bf = w1_p.T.astype(jnp.bfloat16)
        w2_bf = w2_p.astype(jnp.bfloat16)
        w2t_bf = w2_p.T.astype(jnp.bfloat16)

        if d_pad != d:
            x0_flat = jnp.pad(x0_flat, ((0, 0), (0, d_pad - d)))
        tgt = targets.astype(jnp.int32).reshape(b, 1)

        # ---- batch tiling: >= 2 grid steps when possible (both v7x TCs busy),
        # tile capped at 256 rows, sublane-aligned ----
        bb = max(8, min(256, _round_up(-(-b // 2), 8)))
        pad_b = _round_up(b, bb)
        if pad_b != b:
            x0_flat = jnp.pad(x0_flat, ((0, pad_b - b), (0, 0)))
            tgt = jnp.pad(tgt, ((0, pad_b - b), (0, 0)))
        grid = (pad_b // bb,)

        # ---- VMEM budget: double-buffered I/O tiles + double-buffered bf16
        # weights, x2 headroom; clamped <= 48 MiB (v7x has 64 MiB/TC total) ----
        io_bytes = 2 * bb * (2 * d_pad + np_cls + 1) * 4
        w_bytes = 2 * (2 * (d_pad * h_pad + h_pad * np_cls) * 2
                       + (h_pad + np_cls) * 4)
        vmem_limit = int(min(48 * 1024 * 1024,
                             max(16 * 1024 * 1024, 2 * (io_bytes + w_bytes))))

        kernel = functools.partial(
            _pgd_l2_kernel, self.num_steps, self.step_size, self.epsilon)

        logits_p, xadv_flat = pl.pallas_call(
            kernel,
            grid=grid,
            in_specs=[
                pl.BlockSpec((bb, d_pad), lambda i: (i, 0)),       # x0 tile
                pl.BlockSpec((bb, 1), lambda i: (i, 0)),           # int32 targets
                pl.BlockSpec((d_pad, h_pad), lambda i: (0, 0)),    # W1   (bf16)
                pl.BlockSpec((h_pad, d_pad), lambda i: (0, 0)),    # W1^T (bf16)
                pl.BlockSpec((1, h_pad), lambda i: (0, 0)),        # b1   (f32)
                pl.BlockSpec((h_pad, np_cls), lambda i: (0, 0)),   # W2   (bf16)
                pl.BlockSpec((np_cls, h_pad), lambda i: (0, 0)),   # W2^T (bf16)
                pl.BlockSpec((1, np_cls), lambda i: (0, 0)),       # b2   (f32)
            ],
            out_specs=[
                pl.BlockSpec((bb, np_cls), lambda i: (i, 0)),      # padded logits
                pl.BlockSpec((bb, d_pad), lambda i: (i, 0)),       # adversarial x
            ],
            out_shape=[
                jax.ShapeDtypeStruct((pad_b, np_cls), jnp.float32),
                jax.ShapeDtypeStruct((pad_b, d_pad), jnp.float32),
            ],
            compiler_params=pltpu.CompilerParams(
                dimension_semantics=("parallel",),
                vmem_limit_bytes=vmem_limit),
        )(x0_flat, tgt, w1_bf, w1t_bf, b1_p, w2_bf, w2t_bf, b2_p)

        logits = logits_p[:b, :ncls]
        x_adv = xadv_flat[:b, :d].reshape(b, c, h, w)
        return logits, x_adv


def _reference_pgd(params, inputs, targets, step_size, epsilon, num_steps):
    """Pure-JAX reference mirroring the PyTorch module (for validation)."""
    w1, b1, w2, b2 = params
    b = inputs.shape[0]
    x0 = inputs.reshape(b, -1).astype(jnp.float32)
    y = jax.nn.one_hot(targets, w2.shape[1], dtype=jnp.float32)

    def model(x):
        return jnp.maximum(x @ w1 + b1, 0.0) @ w2 + b2

    def loss_fn(x):
        logp = jax.nn.log_softmax(model(x), axis=-1)
        return -jnp.sum(y * logp)          # sum (size_average=False)

    x = x0
    for _ in range(num_steps):
        g = jax.grad(loss_fn)(x)
        g = g / (jnp.linalg.norm(g, axis=-1, keepdims=True) + 1e-9)
        x = x + step_size * epsilon * g
        dx = x - x0
        dx = dx / (jnp.linalg.norm(dx, axis=-1, keepdims=True) + 1e-9) * epsilon
        x = jnp.clip(x0 + dx, 0.0, 1.0)
    return model(x), x.reshape(inputs.shape)


if __name__ == "__main__":
    key = jax.random.PRNGKey(0)
    k_x, k_w1, k_b1, k_w2, k_b2, k_t = jax.random.split(key, 6)

    # Small shapes consistent with an MNIST-style image classifier.
    B, C, H, W = 2, 1, 16, 16
    D = C * H * W          # 256
    HID = 128
    NCLS = 10

    inputs = jax.random.uniform(k_x, (B, C, H, W), dtype=jnp.float32)  # in [0,1]
    targets = jax.random.randint(k_t, (B,), 0, NCLS, dtype=jnp.int32)

    # Deterministic model parameters (the wrapped "model": flatten -> MLP).
    w1 = jax.random.normal(k_w1, (D, HID), dtype=jnp.float32) * 0.05
    b1 = jax.random.normal(k_b1, (HID,), dtype=jnp.float32) * 0.01
    w2 = jax.random.normal(k_w2, (HID, NCLS), dtype=jnp.float32) * 0.05
    b2 = jax.random.normal(k_b2, (NCLS,), dtype=jnp.float32) * 0.01

    config = dict(random_start=True, step_size=0.25, epsilon=1.0,
                  num_steps=5, loss_func='xent')
    attack = AttackPGDL2((w1, b1, w2, b2), config, mode=True)

    logits, x_adv = attack(inputs, targets)
    logits = jax.block_until_ready(logits)
    x_adv = jax.block_until_ready(x_adv)

    assert logits.shape == (B, NCLS) and x_adv.shape == (B, C, H, W)
    assert bool(jnp.all(jnp.isfinite(logits))) and bool(jnp.all(jnp.isfinite(x_adv)))
    assert bool(jnp.all(x_adv >= 0.0)) and bool(jnp.all(x_adv <= 1.0))

    # Loose tolerance vs. the pure-JAX f32 reference: the kernel uses bf16 MXU
    # operands, approx reciprocal and rsqrt(.+1e-18) instead of (norm+1e-9),
    # so only gross direction/padding errors should trip this.
    ref_logits, ref_xadv = _reference_pgd((w1, b1, w2, b2), inputs, targets,
                                          config['step_size'], config['epsilon'],
                                          config['num_steps'])
    assert float(jnp.max(jnp.abs(logits - ref_logits))) < 1e-1
    assert float(jnp.max(jnp.abs(x_adv - ref_xadv))) < 1e-1

    print("KERNEL_OK")
</pallas_src>

<mosaic_0001>
module attributes {stable_mosaic.version = 11 : i64} {
  func.func @_pgd_l2_kernel(%arg0: i32, %arg1: memref<8x256xf32, #tpu.memory_space<vmem>>, %arg2: memref<8x1xi32, #tpu.memory_space<vmem>>, %arg3: memref<256x128xbf16, #tpu.memory_space<vmem>>, %arg4: memref<128x256xbf16, #tpu.memory_space<vmem>>, %arg5: memref<1x128xf32, #tpu.memory_space<vmem>>, %arg6: memref<128x128xbf16, #tpu.memory_space<vmem>>, %arg7: memref<128x128xbf16, #tpu.memory_space<vmem>>, %arg8: memref<1x128xf32, #tpu.memory_space<vmem>>, %arg9: memref<8x128xf32, #tpu.memory_space<vmem>>, %arg10: memref<8x256xf32, #tpu.memory_space<vmem>>) attributes {dimension_semantics = [#tpu.dimension_semantics<parallel>], iteration_bounds = array<i64: 1>, scalar_prefetch = 0 : i64, scratch_operands = 0 : i64, tpu.core_type = #tpu.core_type<tc>, window_params = [{transform_indices = @transform_0, window_bounds = array<i64: 8, 256>}, {transform_indices = @transform_1, window_bounds = array<i64: 8, 1>}, {pipeline_mode = #tpu.pipeline_mode<synchronous>, transform_indices = @transform_2, window_bounds = array<i64: 256, 128>}, {pipeline_mode = #tpu.pipeline_mode<synchronous>, transform_indices = @transform_3, window_bounds = array<i64: 128, 256>}, {pipeline_mode = #tpu.pipeline_mode<synchronous>, transform_indices = @transform_4, window_bounds = array<i64: 1, 128>}, {pipeline_mode = #tpu.pipeline_mode<synchronous>, transform_indices = @transform_5, window_bounds = array<i64: 128, 128>}, {pipeline_mode = #tpu.pipeline_mode<synchronous>, transform_indices = @transform_6, window_bounds = array<i64: 128, 128>}, {pipeline_mode = #tpu.pipeline_mode<synchronous>, transform_indices = @transform_7, window_bounds = array<i64: 1, 128>}, {transform_indices = @transform_8, window_bounds = array<i64: 8, 128>}, {transform_indices = @transform_9, window_bounds = array<i64: 8, 256>}]} {
    %c0 = arith.constant 0 : index
    %c0_0 = arith.constant 0 : index
    %0 = vector.load %arg1[%c0, %c0_0] : memref<8x256xf32, #tpu.memory_space<vmem>>, vector<8x256xf32>
    %c0_1 = arith.constant 0 : index
    %c0_2 = arith.constant 0 : index
    %1 = vector.load %arg3[%c0_1, %c0_2] : memref<256x128xbf16, #tpu.memory_space<vmem>>, vector<256x128xbf16>
    %c0_3 = arith.constant 0 : index
    %c0_4 = arith.constant 0 : index
    %2 = vector.load %arg4[%c0_3, %c0_4] : memref<128x256xbf16, #tpu.memory_space<vmem>>, vector<128x256xbf16>
    %c0_5 = arith.constant 0 : index
    %c0_6 = arith.constant 0 : index
    %3 = vector.load %arg6[%c0_5, %c0_6] : memref<128x128xbf16, #tpu.memory_space<vmem>>, vector<128x128xbf16>
    %c0_7 = arith.constant 0 : index
    %c0_8 = arith.constant 0 : index
    %4 = vector.load %arg7[%c0_7, %c0_8] : memref<128x128xbf16, #tpu.memory_space<vmem>>, vector<128x128xbf16>
    %c0_9 = arith.constant 0 : index
    %c0_10 = arith.constant 0 : index
    %5 = vector.load %arg5[%c0_9, %c0_10] : memref<1x128xf32, #tpu.memory_space<vmem>>, vector<1x128xf32>
    %c0_11 = arith.constant 0 : index
    %c0_12 = arith.constant 0 : index
    %6 = vector.load %arg8[%c0_11, %c0_12] : memref<1x128xf32, #tpu.memory_space<vmem>>, vector<1x128xf32>
    %c0_13 = arith.constant 0 : index
    %c0_14 = arith.constant 0 : index
    %7 = vector.load %arg2[%c0_13, %c0_14] : memref<8x1xi32, #tpu.memory_space<vmem>>, vector<8x1xi32>
    %8 = tpu.iota {dimensions = array<i32: 1>} : vector<8x128xi32>
    %9 = vector.broadcast %7 : vector<8x1xi32> to vector<8x128xi32>
    %10 = arith.cmpi eq, %8, %9 : vector<8x128xi32>
    %c0_i32 = arith.constant 0 : i32
    %11 = arith.truncf %0 : vector<8x256xf32> to vector<8x256xbf16>
    %cst = arith.constant dense<0.000000e+00> : vector<8x128xf32>
    %12 = tpu.matmul %11, %1, %cst {dimension_numbers = #tpu.dot_dimension_numbers<[1], [0], [0], [1], [0, 0, 1, 1], [], []>} : vector<8x256xbf16>, vector<256x128xbf16>, vector<8x128xf32> -> vector<8x128xf32>
    %13 = vector.broadcast %5 : vector<1x128xf32> to vector<8x128xf32>
    %14 = arith.addf %12, %13 : vector<8x128xf32>
    %cst_15 = arith.constant 0.000000e+00 : f32
    %15 = vector.broadcast %cst_15 : f32 to vector<8x128xf32>
    %16 = arith.maximumf %14, %15 : vector<8x128xf32>
    %17 = arith.truncf %16 : vector<8x128xf32> to vector<8x128xbf16>
    %cst_16 = arith.constant dense<0.000000e+00> : vector<8x128xf32>
    %18 = tpu.matmul %17, %3, %cst_16 {dimension_numbers = #tpu.dot_dimension_numbers<[1], [0], [0], [1], [0, 0, 1, 1], [], []>} : vector<8x128xbf16>, vector<128x128xbf16>, vector<8x128xf32> -> vector<8x128xf32>
    %19 = vector.broadcast %6 : vector<1x128xf32> to vector<8x128xf32>
    %20 = arith.addf %18, %19 : vector<8x128xf32>
    %cst_17 = arith.constant dense<0xFF800000> : vector<8xf32>
    %21 = vector.multi_reduction <maximumf>, %20, %cst_17 [1] : vector<8x128xf32> to vector<8xf32>
    %22 = vector.shape_cast %21 : vector<8xf32> to vector<8x1xf32>
    %23 = vector.broadcast %22 : vector<8x1xf32> to vector<8x128xf32>
    %24 = arith.subf %20, %23 : vector<8x128xf32>
    %25 = math.exp %24 : vector<8x128xf32>
    %cst_18 = arith.constant dense<0.000000e+00> : vector<8xf32>
    %26 = vector.multi_reduction <add>, %25, %cst_18 [1] : vector<8x128xf32> to vector<8xf32>
    %27 = vector.shape_cast %26 : vector<8xf32> to vector<8x1xf32>
    %28 = tpu.reciprocal %27 {approx = true} : vector<8x1xf32> -> vector<8x1xf32>
    %29 = vector.broadcast %28 : vector<8x1xf32> to vector<8x128xf32>
    %30 = arith.mulf %25, %29 : vector<8x128xf32>
    %cst_19 = arith.constant 1.000000e+00 : f32
    %31 = vector.broadcast %cst_19 : f32 to vector<8x128xf32>
    %32 = arith.subf %30, %31 : vector<8x128xf32>
    %33 = arith.select %10, %32, %30 : vector<8x128xi1>, vector<8x128xf32>
    %34 = arith.truncf %33 : vector<8x128xf32> to vector<8x128xbf16>
    %cst_20 = arith.constant dense<0.000000e+00> : vector<8x128xf32>
    %35 = tpu.matmul %34, %4, %cst_20 {dimension_numbers = #tpu.dot_dimension_numbers<[1], [0], [0], [1], [0, 0, 1, 1], [], []>} : vector<8x128xbf16>, vector<128x128xbf16>, vector<8x128xf32> -> vector<8x128xf32>
    %cst_21 = arith.constant 0.000000e+00 : f32
    %36 = vector.broadcast %cst_21 : f32 to vector<8x128xf32>
    %37 = arith.cmpf ogt, %14, %36 : vector<8x128xf32>
    %cst_22 = arith.constant 0.000000e+00 : f32
    %38 = vector.broadcast %cst_22 : f32 to vector<8x128xf32>
    %39 = arith.select %37, %35, %38 : vector<8x128xi1>, vector<8x128xf32>
    %40 = arith.truncf %39 : vector<8x128xf32> to vector<8x128xbf16>
    %cst_23 = arith.constant dense<0.000000e+00> : vector<8x256xf32>
    %41 = tpu.matmul %40, %2, %cst_23 {dimension_numbers = #tpu.dot_dimension_numbers<[1], [0], [0], [1], [0, 0, 1, 1], [], []>} : vector<8x128xbf16>, vector<128x256xbf16>, vector<8x256xf32> -> vector<8x256xf32>
    %42 = arith.mulf %41, %41 : vector<8x256xf32>
    %cst_24 = arith.constant dense<0.000000e+00> : vector<8xf32>
    %43 = vector.multi_reduction <add>, %42, %cst_24 [1] : vector<8x256xf32> to vector<8xf32>
    %44 = vector.shape_cast %43 : vector<8xf32> to vector<8x1xf32>
    %cst_25 = arith.constant 1.000000e-18 : f32
    %45 = vector.broadcast %cst_25 : f32 to vector<8x1xf32>
    %46 = arith.addf %44, %45 : vector<8x1xf32>
    %47 = math.rsqrt %46 : vector<8x1xf32>
    %48 = vector.broadcast %47 : vector<8x1xf32> to vector<8x256xf32>
    %49 = arith.mulf %41, %48 : vector<8x256xf32>
    %cst_26 = arith.constant 2.500000e-01 : f32
    %50 = vector.broadcast %cst_26 : f32 to vector<8x256xf32>
    %51 = arith.mulf %50, %49 : vector<8x256xf32>
    %52 = arith.addf %0, %51 : vector<8x256xf32>
    %53 = arith.subf %52, %0 : vector<8x256xf32>
    %54 = arith.mulf %53, %53 : vector<8x256xf32>
    %cst_27 = arith.constant dense<0.000000e+00> : vector<8xf32>
    %55 = vector.multi_reduction <add>, %54, %cst_27 [1] : vector<8x256xf32> to vector<8xf32>
    %56 = vector.shape_cast %55 : vector<8xf32> to vector<8x1xf32>
    %cst_28 = arith.constant 1.000000e-18 : f32
    %57 = vector.broadcast %cst_28 : f32 to vector<8x1xf32>
    %58 = arith.addf %56, %57 : vector<8x1xf32>
    %59 = math.rsqrt %58 : vector<8x1xf32>
    %cst_29 = arith.constant 1.000000e+00 : f32
    %60 = vector.broadcast %cst_29 : f32 to vector<8x1xf32>
    %61 = arith.mulf %60, %59 : vector<8x1xf32>
    %62 = vector.broadcast %61 : vector<8x1xf32> to vector<8x256xf32>
    %63 = arith.mulf %53, %62 : vector<8x256xf32>
    %64 = arith.addf %0, %63 : vector<8x256xf32>
    %cst_30 = arith.constant 0.000000e+00 : f32
    %cst_31 = arith.constant 1.000000e+00 : f32
    %65 = vector.broadcast %cst_30 : f32 to vector<8x256xf32>
    %66 = arith.maximumf %65, %64 : vector<8x256xf32>
    %67 = vector.broadcast %cst_31 : f32 to vector<8x256xf32>
    %68 = arith.minimumf %67, %66 : vector<8x256xf32>
    %c1_i32 = arith.constant 1 : i32
    %69 = arith.truncf %68 : vector<8x256xf32> to vector<8x256xbf16>
    %cst_32 = arith.constant dense<0.000000e+00> : vector<8x128xf32>
    %70 = tpu.matmul %69, %1, %cst_32 {dimension_numbers = #tpu.dot_dimension_numbers<[1], [0], [0], [1], [0, 0, 1, 1], [], []>} : vector<8x256xbf16>, vector<256x128xbf16>, vector<8x128xf32> -> vector<8x128xf32>
    %71 = vector.broadcast %5 : vector<1x128xf32> to vector<8x128xf32>
    %72 = arith.addf %70, %71 : vector<8x128xf32>
    %cst_33 = arith.constant 0.000000e+00 : f32
    %73 = vector.broadcast %cst_33 : f32 to vector<8x128xf32>
    %74 = arith.maximumf %72, %73 : vector<8x128xf32>
    %75 = arith.truncf %74 : vector<8x128xf32> to vector<8x128xbf16>
    %cst_34 = arith.constant dense<0.000000e+00> : vector<8x128xf32>
    %76 = tpu.matmul %75, %3, %cst_34 {dimension_numbers = #tpu.dot_dimension_numbers<[1], [0], [0], [1], [0, 0, 1, 1], [], []>} : vector<8x128xbf16>, vector<128x128xbf16>, vector<8x128xf32> -> vector<8x128xf32>
    %77 = vector.broadcast %6 : vector<1x128xf32> to vector<8x128xf32>
    %78 = arith.addf %76, %77 : vector<8x128xf32>
    %cst_35 = arith.constant dense<0xFF800000> : vector<8xf32>
    %79 = vector.multi_reduction <maximumf>, %78, %cst_35 [1] : vector<8x128xf32> to vector<8xf32>
    %80 = vector.shape_cast %79 : vector<8xf32> to vector<8x1xf32>
    %81 = vector.broadcast %80 : vector<8x1xf32> to vector<8x128xf32>
    %82 = arith.subf %78, %81 : vector<8x128xf32>
    %83 = math.exp %82 : vector<8x128xf32>
    %cst_36 = arith.constant dense<0.000000e+00> : vector<8xf32>
    %84 = vector.multi_reduction <add>, %83, %cst_36 [1] : vector<8x128xf32> to vector<8xf32>
    %85 = vector.shape_cast %84 : vector<8xf32> to vector<8x1xf32>
    %86 = tpu.reciprocal %85 {approx = true} : vector<8x1xf32> -> vector<8x1xf32>
    %87 = vector.broadcast %86 : vector<8x1xf32> to vector<8x128xf32>
    %88 = arith.mulf %83, %87 : vector<8x128xf32>
    %cst_37 = arith.constant 1.000000e+00 : f32
    %89 = vector.broadcast %cst_37 : f32 to vector<8x128xf32>
    %90 = arith.subf %88, %89 : vector<8x128xf32>
    %91 = arith.select %10, %90, %88 : vector<8x128xi1>, vector<8x128xf32>
    %92 = arith.truncf %91 : vector<8x128xf32> to vector<8x128xbf16>
    %cst_38 = arith.constant dense<0.000000e+00> : vector<8x128xf32>
    %93 = tpu.matmul %92, %4, %cst_38 {dimension_numbers = #tpu.dot_dimension_numbers<[1], [0], [0], [1], [0, 0, 1, 1], [], []>} : vector<8x128xbf16>, vector<128x128xbf16>, vector<8x128xf32> -> vector<8x128xf32>
    %cst_39 = arith.constant 0.000000e+00 : f32
    %94 = vector.broadcast %cst_39 : f32 to vector<8x128xf32>
    %95 = arith.cmpf ogt, %72, %94 : vector<8x128xf32>
    %cst_40 = arith.constant 0.000000e+00 : f32
    %96 = vector.broadcast %cst_40 : f32 to vector<8x128xf32>
    %97 = arith.select %95, %93, %96 : vector<8x128xi1>, vector<8x128xf32>
    %98 = arith.truncf %97 : vector<8x128xf32> to vector<8x128xbf16>
    %cst_41 = arith.constant dense<0.000000e+00> : vector<8x256xf32>
    %99 = tpu.matmul %98, %2, %cst_41 {dimension_numbers = #tpu.dot_dimension_numbers<[1], [0], [0], [1], [0, 0, 1, 1], [], []>} : vector<8x128xbf16>, vector<128x256xbf16>, vector<8x256xf32> -> vector<8x256xf32>
    %100 = arith.mulf %99, %99 : vector<8x256xf32>
    %cst_42 = arith.constant dense<0.000000e+00> : vector<8xf32>
    %101 = vector.multi_reduction <add>, %100, %cst_42 [1] : vector<8x256xf32> to vector<8xf32>
    %102 = vector.shape_cast %101 : vector<8xf32> to vector<8x1xf32>
    %cst_43 = arith.constant 1.000000e-18 : f32
    %103 = vector.broadcast %cst_43 : f32 to vector<8x1xf32>
    %104 = arith.addf %102, %103 : vector<8x1xf32>
    %105 = math.rsqrt %104 : vector<8x1xf32>
    %106 = vector.broadcast %105 : vector<8x1xf32> to vector<8x256xf32>
    %107 = arith.mulf %99, %106 : vector<8x256xf32>
    %cst_44 = arith.constant 2.500000e-01 : f32
    %108 = vector.broadcast %cst_44 : f32 to vector<8x256xf32>
    %109 = arith.mulf %108, %107 : vector<8x256xf32>
    %110 = arith.addf %68, %109 : vector<8x256xf32>
    %111 = arith.subf %110, %0 : vector<8x256xf32>
    %112 = arith.mulf %111, %111 : vector<8x256xf32>
    %cst_45 = arith.constant dense<0.000000e+00> : vector<8xf32>
    %113 = vector.multi_reduction <add>, %112, %cst_45 [1] : vector<8x256xf32> to vector<8xf32>
    %114 = vector.shape_cast %113 : vector<8xf32> to vector<8x1xf32>
    %cst_46 = arith.constant 1.000000e-18 : f32
    %115 = vector.broadcast %cst_46 : f32 to vector<8x1xf32>
    %116 = arith.addf %114, %115 : vector<8x1xf32>
    %117 = math.rsqrt %116 : vector<8x1xf32>
    %cst_47 = arith.constant 1.000000e+00 : f32
    %118 = vector.broadcast %cst_47 : f32 to vector<8x1xf32>
    %119 = arith.mulf %118, %117 : vector<8x1xf32>
    %120 = vector.broadcast %119 : vector<8x1xf32> to vector<8x256xf32>
    %121 = arith.mulf %111, %120 : vector<8x256xf32>
    %122 = arith.addf %0, %121 : vector<8x256xf32>
    %cst_48 = arith.constant 0.000000e+00 : f32
    %cst_49 = arith.constant 1.000000e+00 : f32
    %123 = vector.broadcast %cst_48 : f32 to vector<8x256xf32>
    %124 = arith.maximumf %123, %122 : vector<8x256xf32>
    %125 = vector.broadcast %cst_49 : f32 to vector<8x256xf32>
    %126 = arith.minimumf %125, %124 : vector<8x256xf32>
    %c2_i32 = arith.constant 2 : i32
    %127 = arith.truncf %126 : vector<8x256xf32> to vector<8x256xbf16>
    %cst_50 = arith.constant dense<0.000000e+00> : vector<8x128xf32>
    %128 = tpu.matmul %127, %1, %cst_50 {dimension_numbers = #tpu.dot_dimension_numbers<[1], [0], [0], [1], [0, 0, 1, 1], [], []>} : vector<8x256xbf16>, vector<256x128xbf16>, vector<8x128xf32> -> vector<8x128xf32>
    %129 = vector.broadcast %5 : vector<1x128xf32> to vector<8x128xf32>
    %130 = arith.addf %128, %129 : vector<8x128xf32>
    %cst_51 = arith.constant 0.000000e+00 : f32
    %131 = vector.broadcast %cst_51 : f32 to vector<8x128xf32>
    %132 = arith.maximumf %130, %131 : vector<8x128xf32>
    %133 = arith.truncf %132 : vector<8x128xf32> to vector<8x128xbf16>
    %cst_52 = arith.constant dense<0.000000e+00> : vector<8x128xf32>
    %134 = tpu.matmul %133, %3, %cst_52 {dimension_numbers = #tpu.dot_dimension_numbers<[1], [0], [0], [1], [0, 0, 1, 1], [], []>} : vector<8x128xbf16>, vector<128x128xbf16>, vector<8x128xf32> -> vector<8x128xf32>
    %135 = vector.broadcast %6 : vector<1x128xf32> to vector<8x128xf32>
    %136 = arith.addf %134, %135 : vector<8x128xf32>
    %cst_53 = arith.constant dense<0xFF800000> : vector<8xf32>
    %137 = vector.multi_reduction <maximumf>, %136, %cst_53 [1] : vector<8x128xf32> to vector<8xf32>
    %138 = vector.shape_cast %137 : vector<8xf32> to vector<8x1xf32>
    %139 = vector.broadcast %138 : vector<8x1xf32> to vector<8x128xf32>
    %140 = arith.subf %136, %139 : vector<8x128xf32>
    %141 = math.exp %140 : vector<8x128xf32>
    %cst_54 = arith.constant dense<0.000000e+00> : vector<8xf32>
    %142 = vector.multi_reduction <add>, %141, %cst_54 [1] : vector<8x128xf32> to vector<8xf32>
    %143 = vector.shape_cast %142 : vector<8xf32> to vector<8x1xf32>
    %144 = tpu.reciprocal %143 {approx = true} : vector<8x1xf32> -> vector<8x1xf32>
    %145 = vector.broadcast %144 : vector<8x1xf32> to vector<8x128xf32>
    %146 = arith.mulf %141, %145 : vector<8x128xf32>
    %cst_55 = arith.constant 1.000000e+00 : f32
    %147 = vector.broadcast %cst_55 : f32 to vector<8x128xf32>
    %148 = arith.subf %146, %147 : vector<8x128xf32>
    %149 = arith.select %10, %148, %146 : vector<8x128xi1>, vector<8x128xf32>
    %150 = arith.truncf %149 : vector<8x128xf32> to vector<8x128xbf16>
    %cst_56 = arith.constant dense<0.000000e+00> : vector<8x128xf32>
    %151 = tpu.matmul %150, %4, %cst_56 {dimension_numbers = #tpu.dot_dimension_numbers<[1], [0], [0], [1], [0, 0, 1, 1], [], []>} : vector<8x128xbf16>, vector<128x128xbf16>, vector<8x128xf32> -> vector<8x128xf32>
    %cst_57 = arith.constant 0.000000e+00 : f32
    %152 = vector.broadcast %cst_57 : f32 to vector<8x128xf32>
    %153 = arith.cmpf ogt, %130, %152 : vector<8x128xf32>
    %cst_58 = arith.constant 0.000000e+00 : f32
    %154 = vector.broadcast %cst_58 : f32 to vector<8x128xf32>
    %155 = arith.select %153, %151, %154 : vector<8x128xi1>, vector<8x128xf32>
    %156 = arith.truncf %155 : vector<8x128xf32> to vector<8x128xbf16>
    %cst_59 = arith.constant dense<0.000000e+00> : vector<8x256xf32>
    %157 = tpu.matmul %156, %2, %cst_59 {dimension_numbers = #tpu.dot_dimension_numbers<[1], [0], [0], [1], [0, 0, 1, 1], [], []>} : vector<8x128xbf16>, vector<128x256xbf16>, vector<8x256xf32> -> vector<8x256xf32>
    %158 = arith.mulf %157, %157 : vector<8x256xf32>
    %cst_60 = arith.constant dense<0.000000e+00> : vector<8xf32>
    %159 = vector.multi_reduction <add>, %158, %cst_60 [1] : vector<8x256xf32> to vector<8xf32>
    %160 = vector.shape_cast %159 : vector<8xf32> to vector<8x1xf32>
    %cst_61 = arith.constant 1.000000e-18 : f32
    %161 = vector.broadcast %cst_61 : f32 to vector<8x1xf32>
    %162 = arith.addf %160, %161 : vector<8x1xf32>
    %163 = math.rsqrt %162 : vector<8x1xf32>
    %164 = vector.broadcast %163 : vector<8x1xf32> to vector<8x256xf32>
    %165 = arith.mulf %157, %164 : vector<8x256xf32>
    %cst_62 = arith.constant 2.500000e-01 : f32
    %166 = vector.broadcast %cst_62 : f32 to vector<8x256xf32>
    %167 = arith.mulf %166, %165 : vector<8x256xf32>
    %168 = arith.addf %126, %167 : vector<8x256xf32>
    %169 = arith.subf %168, %0 : vector<8x256xf32>
    %170 = arith.mulf %169, %169 : vector<8x256xf32>
    %cst_63 = arith.constant dense<0.000000e+00> : vector<8xf32>
    %171 = vector.multi_reduction <add>, %170, %cst_63 [1] : vector<8x256xf32> to vector<8xf32>
    %172 = vector.shape_cast %171 : vector<8xf32> to vector<8x1xf32>
    %cst_64 = arith.constant 1.000000e-18 : f32
    %173 = vector.broadcast %cst_64 : f32 to vector<8x1xf32>
    %174 = arith.addf %172, %173 : vector<8x1xf32>
    %175 = math.rsqrt %174 : vector<8x1xf32>
    %cst_65 = arith.constant 1.000000e+00 : f32
    %176 = vector.broadcast %cst_65 : f32 to vector<8x1xf32>
    %177 = arith.mulf %176, %175 : vector<8x1xf32>
    %178 = vector.broadcast %177 : vector<8x1xf32> to vector<8x256xf32>
    %179 = arith.mulf %169, %178 : vector<8x256xf32>
    %180 = arith.addf %0, %179 : vector<8x256xf32>
    %cst_66 = arith.constant 0.000000e+00 : f32
    %cst_67 = arith.constant 1.000000e+00 : f32
    %181 = vector.broadcast %cst_66 : f32 to vector<8x256xf32>
    %182 = arith.maximumf %181, %180 : vector<8x256xf32>
    %183 = vector.broadcast %cst_67 : f32 to vector<8x256xf32>
    %184 = arith.minimumf %183, %182 : vector<8x256xf32>
    %c3_i32 = arith.constant 3 : i32
    %185 = arith.truncf %184 : vector<8x256xf32> to vector<8x256xbf16>
    %cst_68 = arith.constant dense<0.000000e+00> : vector<8x128xf32>
    %186 = tpu.matmul %185, %1, %cst_68 {dimension_numbers = #tpu.dot_dimension_numbers<[1], [0], [0], [1], [0, 0, 1, 1], [], []>} : vector<8x256xbf16>, vector<256x128xbf16>, vector<8x128xf32> -> vector<8x128xf32>
    %187 = vector.broadcast %5 : vector<1x128xf32> to vector<8x128xf32>
    %188 = arith.addf %186, %187 : vector<8x128xf32>
    %cst_69 = arith.constant 0.000000e+00 : f32
    %189 = vector.broadcast %cst_69 : f32 to vector<8x128xf32>
    %190 = arith.maximumf %188, %189 : vector<8x128xf32>
    %191 = arith.truncf %190 : vector<8x128xf32> to vector<8x128xbf16>
    %cst_70 = arith.constant dense<0.000000e+00> : vector<8x128xf32>
    %192 = tpu.matmul %191, %3, %cst_70 {dimension_numbers = #tpu.dot_dimension_numbers<[1], [0], [0], [1], [0, 0, 1, 1], [], []>} : vector<8x128xbf16>, vector<128x128xbf16>, vector<8x128xf32> -> vector<8x128xf32>
    %193 = vector.broadcast %6 : vector<1x128xf32> to vector<8x128xf32>
    %194 = arith.addf %192, %193 : vector<8x128xf32>
    %cst_71 = arith.constant dense<0xFF800000> : vector<8xf32>
    %195 = vector.multi_reduction <maximumf>, %194, %cst_71 [1] : vector<8x128xf32> to vector<8xf32>
    %196 = vector.shape_cast %195 : vector<8xf32> to vector<8x1xf32>
    %197 = vector.broadcast %196 : vector<8x1xf32> to vector<8x128xf32>
    %198 = arith.subf %194, %197 : vector<8x128xf32>
    %199 = math.exp %198 : vector<8x128xf32>
    %cst_72 = arith.constant dense<0.000000e+00> : vector<8xf32>
    %200 = vector.multi_reduction <add>, %199, %cst_72 [1] : vector<8x128xf32> to vector<8xf32>
    %201 = vector.shape_cast %200 : vector<8xf32> to vector<8x1xf32>
    %202 = tpu.reciprocal %201 {approx = true} : vector<8x1xf32> -> vector<8x1xf32>
    %203 = vector.broadcast %202 : vector<8x1xf32> to vector<8x128xf32>
    %204 = arith.mulf %199, %203 : vector<8x128xf32>
    %cst_73 = arith.constant 1.000000e+00 : f32
    %205 = vector.broadcast %cst_73 : f32 to vector<8x128xf32>
    %206 = arith.subf %204, %205 : vector<8x128xf32>
    %207 = arith.select %10, %206, %204 : vector<8x128xi1>, vector<8x128xf32>
    %208 = arith.truncf %207 : vector<8x128xf32> to vector<8x128xbf16>
    %cst_74 = arith.constant dense<0.000000e+00> : vector<8x128xf32>
    %209 = tpu.matmul %208, %4, %cst_74 {dimension_numbers = #tpu.dot_dimension_numbers<[1], [0], [0], [1], [0, 0, 1, 1], [], []>} : vector<8x128xbf16>, vector<128x128xbf16>, vector<8x128xf32> -> vector<8x128xf32>
    %cst_75 = arith.constant 0.000000e+00 : f32
    %210 = vector.broadcast %cst_75 : f32 to vector<8x128xf32>
    %211 = arith.cmpf ogt, %188, %210 : vector<8x128xf32>
    %cst_76 = arith.constant 0.000000e+00 : f32
    %212 = vector.broadcast %cst_76 : f32 to vector<8x128xf32>
    %213 = arith.select %211, %209, %212 : vector<8x128xi1>, vector<8x128xf32>
    %214 = arith.truncf %213 : vector<8x128xf32> to vector<8x128xbf16>
    %cst_77 = arith.constant dense<0.000000e+00> : vector<8x256xf32>
    %215 = tpu.matmul %214, %2, %cst_77 {dimension_numbers = #tpu.dot_dimension_numbers<[1], [0], [0], [1], [0, 0, 1, 1], [], []>} : vector<8x128xbf16>, vector<128x256xbf16>, vector<8x256xf32> -> vector<8x256xf32>
    %216 = arith.mulf %215, %215 : vector<8x256xf32>
    %cst_78 = arith.constant dense<0.000000e+00> : vector<8xf32>
    %217 = vector.multi_reduction <add>, %216, %cst_78 [1] : vector<8x256xf32> to vector<8xf32>
    %218 = vector.shape_cast %217 : vector<8xf32> to vector<8x1xf32>
    %cst_79 = arith.constant 1.000000e-18 : f32
    %219 = vector.broadcast %cst_79 : f32 to vector<8x1xf32>
    %220 = arith.addf %218, %219 : vector<8x1xf32>
    %221 = math.rsqrt %220 : vector<8x1xf32>
    %222 = vector.broadcast %221 : vector<8x1xf32> to vector<8x256xf32>
    %223 = arith.mulf %215, %222 : vector<8x256xf32>
    %cst_80 = arith.constant 2.500000e-01 : f32
    %224 = vector.broadcast %cst_80 : f32 to vector<8x256xf32>
    %225 = arith.mulf %224, %223 : vector<8x256xf32>
    %226 = arith.addf %184, %225 : vector<8x256xf32>
    %227 = arith.subf %226, %0 : vector<8x256xf32>
    %228 = arith.mulf %227, %227 : vector<8x256xf32>
    %cst_81 = arith.constant dense<0.000000e+00> : vector<8xf32>
    %229 = vector.multi_reduction <add>, %228, %cst_81 [1] : vector<8x256xf32> to vector<8xf32>
    %230 = vector.shape_cast %229 : vector<8xf32> to vector<8x1xf32>
    %cst_82 = arith.constant 1.000000e-18 : f32
    %231 = vector.broadcast %cst_82 : f32 to vector<8x1xf32>
    %232 = arith.addf %230, %231 : vector<8x1xf32>
    %233 = math.rsqrt %232 : vector<8x1xf32>
    %cst_83 = arith.constant 1.000000e+00 : f32
    %234 = vector.broadcast %cst_83 : f32 to vector<8x1xf32>
    %235 = arith.mulf %234, %233 : vector<8x1xf32>
    %236 = vector.broadcast %235 : vector<8x1xf32> to vector<8x256xf32>
    %237 = arith.mulf %227, %236 : vector<8x256xf32>
    %238 = arith.addf %0, %237 : vector<8x256xf32>
    %cst_84 = arith.constant 0.000000e+00 : f32
    %cst_85 = arith.constant 1.000000e+00 : f32
    %239 = vector.broadcast %cst_84 : f32 to vector<8x256xf32>
    %240 = arith.maximumf %239, %238 : vector<8x256xf32>
    %241 = vector.broadcast %cst_85 : f32 to vector<8x256xf32>
    %242 = arith.minimumf %241, %240 : vector<8x256xf32>
    %c4_i32 = arith.constant 4 : i32
    %243 = arith.truncf %242 : vector<8x256xf32> to vector<8x256xbf16>
    %cst_86 = arith.constant dense<0.000000e+00> : vector<8x128xf32>
    %244 = tpu.matmul %243, %1, %cst_86 {dimension_numbers = #tpu.dot_dimension_numbers<[1], [0], [0], [1], [0, 0, 1, 1], [], []>} : vector<8x256xbf16>, vector<256x128xbf16>, vector<8x128xf32> -> vector<8x128xf32>
    %245 = vector.broadcast %5 : vector<1x128xf32> to vector<8x128xf32>
    %246 = arith.addf %244, %245 : vector<8x128xf32>
    %cst_87 = arith.constant 0.000000e+00 : f32
    %247 = vector.broadcast %cst_87 : f32 to vector<8x128xf32>
    %248 = arith.maximumf %246, %247 : vector<8x128xf32>
    %249 = arith.truncf %248 : vector<8x128xf32> to vector<8x128xbf16>
    %cst_88 = arith.constant dense<0.000000e+00> : vector<8x128xf32>
    %250 = tpu.matmul %249, %3, %cst_88 {dimension_numbers = #tpu.dot_dimension_numbers<[1], [0], [0], [1], [0, 0, 1, 1], [], []>} : vector<8x128xbf16>, vector<128x128xbf16>, vector<8x128xf32> -> vector<8x128xf32>
    %251 = vector.broadcast %6 : vector<1x128xf32> to vector<8x128xf32>
    %252 = arith.addf %250, %251 : vector<8x128xf32>
    %cst_89 = arith.constant dense<0xFF800000> : vector<8xf32>
    %253 = vector.multi_reduction <maximumf>, %252, %cst_89 [1] : vector<8x128xf32> to vector<8xf32>
    %254 = vector.shape_cast %253 : vector<8xf32> to vector<8x1xf32>
    %255 = vector.broadcast %254 : vector<8x1xf32> to vector<8x128xf32>
    %256 = arith.subf %252, %255 : vector<8x128xf32>
    %257 = math.exp %256 : vector<8x128xf32>
    %cst_90 = arith.constant dense<0.000000e+00> : vector<8xf32>
    %258 = vector.multi_reduction <add>, %257, %cst_90 [1] : vector<8x128xf32> to vector<8xf32>
    %259 = vector.shape_cast %258 : vector<8xf32> to vector<8x1xf32>
    %260 = tpu.reciprocal %259 {approx = true} : vector<8x1xf32> -> vector<8x1xf32>
    %261 = vector.broadcast %260 : vector<8x1xf32> to vector<8x128xf32>
    %262 = arith.mulf %257, %261 : vector<8x128xf32>
    %cst_91 = arith.constant 1.000000e+00 : f32
    %263 = vector.broadcast %cst_91 : f32 to vector<8x128xf32>
    %264 = arith.subf %262, %263 : vector<8x128xf32>
    %265 = arith.select %10, %264, %262 : vector<8x128xi1>, vector<8x128xf32>
    %266 = arith.truncf %265 : vector<8x128xf32> to vector<8x128xbf16>
    %cst_92 = arith.constant dense<0.000000e+00> : vector<8x128xf32>
    %267 = tpu.matmul %266, %4, %cst_92 {dimension_numbers = #tpu.dot_dimension_numbers<[1], [0], [0], [1], [0, 0, 1, 1], [], []>} : vector<8x128xbf16>, vector<128x128xbf16>, vector<8x128xf32> -> vector<8x128xf32>
    %cst_93 = arith.constant 0.000000e+00 : f32
    %268 = vector.broadcast %cst_93 : f32 to vector<8x128xf32>
    %269 = arith.cmpf ogt, %246, %268 : vector<8x128xf32>
    %cst_94 = arith.constant 0.000000e+00 : f32
    %270 = vector.broadcast %cst_94 : f32 to vector<8x128xf32>
    %271 = arith.select %269, %267, %270 : vector<8x128xi1>, vector<8x128xf32>
    %272 = arith.truncf %271 : vector<8x128xf32> to vector<8x128xbf16>
    %cst_95 = arith.constant dense<0.000000e+00> : vector<8x256xf32>
    %273 = tpu.matmul %272, %2, %cst_95 {dimension_numbers = #tpu.dot_dimension_numbers<[1], [0], [0], [1], [0, 0, 1, 1], [], []>} : vector<8x128xbf16>, vector<128x256xbf16>, vector<8x256xf32> -> vector<8x256xf32>
    %274 = arith.mulf %273, %273 : vector<8x256xf32>
    %cst_96 = arith.constant dense<0.000000e+00> : vector<8xf32>
    %275 = vector.multi_reduction <add>, %274, %cst_96 [1] : vector<8x256xf32> to vector<8xf32>
    %276 = vector.shape_cast %275 : vector<8xf32> to vector<8x1xf32>
    %cst_97 = arith.constant 1.000000e-18 : f32
    %277 = vector.broadcast %cst_97 : f32 to vector<8x1xf32>
    %278 = arith.addf %276, %277 : vector<8x1xf32>
    %279 = math.rsqrt %278 : vector<8x1xf32>
    %280 = vector.broadcast %279 : vector<8x1xf32> to vector<8x256xf32>
    %281 = arith.mulf %273, %280 : vector<8x256xf32>
    %cst_98 = arith.constant 2.500000e-01 : f32
    %282 = vector.broadcast %cst_98 : f32 to vector<8x256xf32>
    %283 = arith.mulf %282, %281 : vector<8x256xf32>
    %284 = arith.addf %242, %283 : vector<8x256xf32>
    %285 = arith.subf %284, %0 : vector<8x256xf32>
    %286 = arith.mulf %285, %285 : vector<8x256xf32>
    %cst_99 = arith.constant dense<0.000000e+00> : vector<8xf32>
    %287 = vector.multi_reduction <add>, %286, %cst_99 [1] : vector<8x256xf32> to vector<8xf32>
    %288 = vector.shape_cast %287 : vector<8xf32> to vector<8x1xf32>
    %cst_100 = arith.constant 1.000000e-18 : f32
    %289 = vector.broadcast %cst_100 : f32 to vector<8x1xf32>
    %290 = arith.addf %288, %289 : vector<8x1xf32>
    %291 = math.rsqrt %290 : vector<8x1xf32>
    %cst_101 = arith.constant 1.000000e+00 : f32
    %292 = vector.broadcast %cst_101 : f32 to vector<8x1xf32>
    %293 = arith.mulf %292, %291 : vector<8x1xf32>
    %294 = vector.broadcast %293 : vector<8x1xf32> to vector<8x256xf32>
    %295 = arith.mulf %285, %294 : vector<8x256xf32>
    %296 = arith.addf %0, %295 : vector<8x256xf32>
    %cst_102 = arith.constant 0.000000e+00 : f32
    %cst_103 = arith.constant 1.000000e+00 : f32
    %297 = vector.broadcast %cst_102 : f32 to vector<8x256xf32>
    %298 = arith.maximumf %297, %296 : vector<8x256xf32>
    %299 = vector.broadcast %cst_103 : f32 to vector<8x256xf32>
    %300 = arith.minimumf %299, %298 : vector<8x256xf32>
    %301 = arith.truncf %300 : vector<8x256xf32> to vector<8x256xbf16>
    %cst_104 = arith.constant dense<0.000000e+00> : vector<8x128xf32>
    %302 = tpu.matmul %301, %1, %cst_104 {dimension_numbers = #tpu.dot_dimension_numbers<[1], [0], [0], [1], [0, 0, 1, 1], [], []>} : vector<8x256xbf16>, vector<256x128xbf16>, vector<8x128xf32> -> vector<8x128xf32>
    %303 = vector.broadcast %5 : vector<1x128xf32> to vector<8x128xf32>
    %304 = arith.addf %302, %303 : vector<8x128xf32>
    %cst_105 = arith.constant 0.000000e+00 : f32
    %305 = vector.broadcast %cst_105 : f32 to vector<8x128xf32>
    %306 = arith.maximumf %304, %305 : vector<8x128xf32>
    %307 = arith.truncf %306 : vector<8x128xf32> to vector<8x128xbf16>
    %cst_106 = arith.constant dense<0.000000e+00> : vector<8x128xf32>
    %308 = tpu.matmul %307, %3, %cst_106 {dimension_numbers = #tpu.dot_dimension_numbers<[1], [0], [0], [1], [0, 0, 1, 1], [], []>} : vector<8x128xbf16>, vector<128x128xbf16>, vector<8x128xf32> -> vector<8x128xf32>
    %309 = vector.broadcast %6 : vector<1x128xf32> to vector<8x128xf32>
    %310 = arith.addf %308, %309 : vector<8x128xf32>
    %c0_107 = arith.constant 0 : index
    %c0_108 = arith.constant 0 : index
    %311 = vector.load %arg9[%c0_107, %c0_108] : memref<8x128xf32, #tpu.memory_space<vmem>>, vector<8x128xf32>
    tpu.vector_store %arg9[%c0_107, %c0_108], %310 {strides = array<i32>} : memref<8x128xf32, #tpu.memory_space<vmem>>, vector<8x128xf32>,
    %c0_109 = arith.constant 0 : index
    %c0_110 = arith.constant 0 : index
    %312 = vector.load %arg10[%c0_109, %c0_110] : memref<8x256xf32, #tpu.memory_space<vmem>>, vector<8x256xf32>
    tpu.vector_store %arg10[%c0_109, %c0_110], %300 {strides = array<i32>} : memref<8x256xf32, #tpu.memory_space<vmem>>, vector<8x256xf32>,
    return
  }
  func.func @transform_0(%arg0: i32) -> (i32, i32) {
    %c0_i32 = arith.constant 0 : i32
    %c0_i32_0 = arith.constant 0 : i32
    return %arg0, %c0_i32 : i32, i32
  }
  func.func @transform_1(%arg0: i32) -> (i32, i32) {
    %c0_i32 = arith.constant 0 : i32
    %c0_i32_0 = arith.constant 0 : i32
    return %arg0, %c0_i32 : i32, i32
  }
  func.func @transform_2(%arg0: i32) -> (i32, i32) {
    %c0_i32 = arith.constant 0 : i32
    %c0_i32_0 = arith.constant 0 : i32
    %c0_i32_1 = arith.constant 0 : i32
    return %c0_i32, %c0_i32_0 : i32, i32
  }
  func.func @transform_3(%arg0: i32) -> (i32, i32) {
    %c0_i32 = arith.constant 0 : i32
    %c0_i32_0 = arith.constant 0 : i32
    %c0_i32_1 = arith.constant 0 : i32
    return %c0_i32, %c0_i32_0 : i32, i32
  }
  func.func @transform_4(%arg0: i32) -> (i32, i32) {
    %c0_i32 = arith.constant 0 : i32
    %c0_i32_0 = arith.constant 0 : i32
    %c0_i32_1 = arith.constant 0 : i32
    return %c0_i32, %c0_i32_0 : i32, i32
  }
  func.func @transform_5(%arg0: i32) -> (i32, i32) {
    %c0_i32 = arith.constant 0 : i32
    %c0_i32_0 = arith.constant 0 : i32
    %c0_i32_1 = arith.constant 0 : i32
    return %c0_i32, %c0_i32_0 : i32, i32
  }
  func.func @transform_6(%arg0: i32) -> (i32, i32) {
    %c0_i32 = arith.constant 0 : i32
    %c0_i32_0 = arith.constant 0 : i32
    %c0_i32_1 = arith.constant 0 : i32
    return %c0_i32, %c0_i32_0 : i32, i32
  }
  func.func @transform_7(%arg0: i32) -> (i32, i32) {
    %c0_i32 = arith.constant 0 : i32
    %c0_i32_0 = arith.constant 0 : i32
    %c0_i32_1 = arith.constant 0 : i32
    return %c0_i32, %c0_i32_0 : i32, i32
  }
  func.func @transform_8(%arg0: i32) -> (i32, i32) {
    %c0_i32 = arith.constant 0 : i32
    %c0_i32_0 = arith.constant 0 : i32
    return %arg0, %c0_i32 : i32, i32
  }
  func.func @transform_9(%arg0: i32) -> (i32, i32) {
    %c0_i32 = arith.constant 0 : i32
    %c0_i32_0 = arith.constant 0 : i32
    return %arg0, %c0_i32 : i32, i32
  }
}

</mosaic_0001>

<llo_original>
// kernel: tpu_custom_call.1
$region0: #{tpu_custom_call.1}
  #allocation0 [shape = 'u32[]', space=smem, size = 0x4, offset = 0x4, fixed_abs, tag = 'smem constant byte address 0x4 - core index']
  #allocation1 [shape = 'u32[144,128]{1,0:T(1,128)}', space=vmem, size = 0x12000, scoped, tag = 'internal scratch']
  %s0 = inlined_call_operand.hbm [shape: f32[8,256], index: 0, kind: input, shape index: {}]
  %s1 = inlined_call_operand.vmem [shape: s32[8,1], index: 1, kind: input, shape index: {}]
  %s2 = inlined_call_operand.hbm [shape: bf16[256,128], index: 2, kind: input, shape index: {}]
  %s3 = inlined_call_operand.hbm [shape: bf16[128,256], index: 3, kind: input, shape index: {}]
  %s4 = inlined_call_operand.vmem [shape: f32[1,128], index: 4, kind: input, shape index: {}]
  %s5 = inlined_call_operand.hbm [shape: bf16[128,128], index: 5, kind: input, shape index: {}]
  %s6 = inlined_call_operand.hbm [shape: bf16[128,128], index: 6, kind: input, shape index: {}]
  %s7 = inlined_call_operand.vmem [shape: f32[1,128], index: 7, kind: input, shape index: {}]
  %s8 = inlined_call_operand.hbm [shape: f32[8,128], index: 8, kind: output, shape index: {0}]
  %s9 = inlined_call_operand.hbm [shape: f32[8,256], index: 9, kind: output, shape index: {1}]
  %10 = xla_tuple %s8, %s9
  %s11 = sld [smem:[#allocation0]]
  $region70: #{tpu_custom_call.1} parent=0
    _
  %s13 = ssub.s32 1, %s11
  %s14 = scalar_select 0, %s13, %s11
  $region1: #{tpu_custom_call.1} parent=0
    #allocation2 [shape = 'u8[8192]{0}', space=vmem, size = 0x2000, scoped, tag = 'input window, operand 0, single buffered']
    #allocation3 [shape = 's32[1]{0}', space=sflag, size = 0x4, scoped, tag = 'scoped memory for tpu_custom_call.1']
    #allocation4 [shape = 's32[1]{0}', space=sflag, size = 0x4, scoped, tag = 'scoped memory for tpu_custom_call.1']
    #allocation5 [shape = 'u8[65536]{0}', space=vmem, size = 0x10000, scoped, tag = 'input window, operand 2, single buffered']
    #allocation6 [shape = 's32[1]{0}', space=sflag, size = 0x4, scoped, tag = 'scoped memory for tpu_custom_call.1']
    #allocation7 [shape = 'u8[65536]{0}', space=vmem, size = 0x10000, scoped, tag = 'input window, operand 3, single buffered']
    #allocation8 [shape = 'u8[32768]{0}', space=vmem, size = 0x8000, scoped, tag = 'input window, operand 5, single buffered']
    #allocation9 [shape = 's32[1]{0}', space=sflag, size = 0x4, scoped, tag = 'scoped memory for tpu_custom_call.1']
    #allocation10 [shape = 'u8[32768]{0}', space=vmem, size = 0x8000, scoped, tag = 'input window, operand 6, single buffered']
    #allocation11 [shape = 'u8[4096]{0}', space=vmem, size = 0x1000, scoped, tag = 'output window, operand 0, single buffered']
    #allocation12 [shape = 'u8[8192]{0}', space=vmem, size = 0x2000, scoped, tag = 'output window, operand 1, single buffered']
    #allocation13 [shape = 's32[1]{0}', space=sflag, size = 0x4, scoped, tag = 'scoped memory for tpu_custom_call.1']
    %15 = vsyncpa [#allocation3], 0
    %16 = vsyncpa [#allocation6], 0
    %17 = vsyncpa [#allocation9], 0
    %18 = vsyncpa [#allocation4], 0
    %19 = vsyncpa [#allocation13], 0
    // Predicated region
    $region2: #{tpu_custom_call.1} parent=1 // pred_check
      _
    $region3: #{tpu_custom_call.1} parent=1 // pred_check_branch
      %21 = sbr.rel (0) target = $region5
    $region4: #{tpu_custom_call.1} parent=1 // pred_region
      %s23 = ssub.s32 256, 256
      %24 = vsyncadd [#allocation3], %s23
      %s26 = sshll.u32 [#allocation2], 4
      %s27 = int_to_ptr.vmem [resolvable:$true] %s26
      %29 = dma.hbm_to_vmem [thread:$0]  %s0, 256, %s27, [#allocation3]
    $region5: #{tpu_custom_call.1} parent=1 // pred_fallthru
      _
    // Predicated region
    $region6: #{tpu_custom_call.1} parent=1 // pred_check
      _
    $region7: #{tpu_custom_call.1} parent=1 // pred_check_branch
      %31 = sbr.rel (0) target = $region9
    $region8: #{tpu_custom_call.1} parent=1 // pred_region
      _
    $region9: #{tpu_custom_call.1} parent=1 // pred_fallthru
      _
    // Predicated region
    $region10: #{tpu_custom_call.1} parent=1 // pred_check
      _
    $region11: #{tpu_custom_call.1} parent=1 // pred_check_branch
      %33 = sbr.rel (0) target = $region13
    $region12: #{tpu_custom_call.1} parent=1 // pred_region
      %s35 = ssub.s32 2048, 2048
      %36 = vsyncadd [#allocation6], %s35
      %s37 = sshll.u32 [#allocation5], 4
      %s38 = int_to_ptr.vmem [resolvable:$true] %s37
      %43 = dma.hbm_to_vmem [thread:$0]  %s2, 2048, %s38, [#allocation6], 64, 64, 4
    $region13: #{tpu_custom_call.1} parent=1 // pred_fallthru
      _
    // Predicated region
    $region14: #{tpu_custom_call.1} parent=1 // pred_check
      _
    $region15: #{tpu_custom_call.1} parent=1 // pred_check_branch
      %45 = sbr.rel (0) target = $region17
    $region16: #{tpu_custom_call.1} parent=1 // pred_region
      %s47 = ssub.s32 2048, 2048
      %48 = vsyncadd [#allocation6], %s47
      %s49 = sshll.u32 [#allocation7], 4
      %s50 = int_to_ptr.vmem [resolvable:$true] %s49
      %55 = dma.hbm_to_vmem [thread:$0]  %s3, 2048, %s50, [#allocation6], 128, 128, 8
    $region17: #{tpu_custom_call.1} parent=1 // pred_fallthru
      _
    // Predicated region
    $region18: #{tpu_custom_call.1} parent=1 // pred_check
      _
    $region19: #{tpu_custom_call.1} parent=1 // pred_check_branch
      %57 = sbr.rel (0) target = $region21
    $region20: #{tpu_custom_call.1} parent=1 // pred_region
      _
    $region21: #{tpu_custom_call.1} parent=1 // pred_fallthru
      _
    // Predicated region
    $region22: #{tpu_custom_call.1} parent=1 // pred_check
      _
    $region23: #{tpu_custom_call.1} parent=1 // pred_check_branch
      %59 = sbr.rel (0) target = $region25
    $region24: #{tpu_custom_call.1} parent=1 // pred_region
      %s61 = ssub.s32 1024, 1024
      %62 = vsyncadd [#allocation9], %s61
      %s63 = sshll.u32 [#allocation8], 4
      %s64 = int_to_ptr.vmem [resolvable:$true] %s63
      %69 = dma.hbm_to_vmem [thread:$0]  %s5, 1024, %s64, [#allocation9], 64, 64, 4
    $region25: #{tpu_custom_call.1} parent=1 // pred_fallthru
      _
    // Predicated region
    $region26: #{tpu_custom_call.1} parent=1 // pred_check
      _
    $region27: #{tpu_custom_call.1} parent=1 // pred_check_branch
      %71 = sbr.rel (0) target = $region29
    $region28: #{tpu_custom_call.1} parent=1 // pred_region
      %s73 = ssub.s32 1024, 1024
      %74 = vsyncadd [#allocation9], %s73
      %s75 = sshll.u32 [#allocation10], 4
      %s76 = int_to_ptr.vmem [resolvable:$true] %s75
      %81 = dma.hbm_to_vmem [thread:$0]  %s6, 1024, %s76, [#allocation9], 64, 64, 4
    $region29: #{tpu_custom_call.1} parent=1 // pred_fallthru
      _
    // Predicated region
    $region30: #{tpu_custom_call.1} parent=1 // pred_check
      _
    $region31: #{tpu_custom_call.1} parent=1 // pred_check_branch
      %83 = sbr.rel (0) target = $region33
    $region32: #{tpu_custom_call.1} parent=1 // pred_region
      _
    $region33: #{tpu_custom_call.1} parent=1 // pred_fallthru
      _
    // Predicated region
    $region34: #{tpu_custom_call.1} parent=1 // pred_check
      _
    $region35: #{tpu_custom_call.1} parent=1 // pred_check_branch
      %85 = sbr.rel (0) target = $region37
    $region36: #{tpu_custom_call.1} parent=1 // pred_region
      %86 = dma.done [#allocation3], 256
    $region37: #{tpu_custom_call.1} parent=1 // pred_fallthru
      _
    // Predicated region
    $region38: #{tpu_custom_call.1} parent=1 // pred_check
      _
    $region39: #{tpu_custom_call.1} parent=1 // pred_check_branch
      %88 = sbr.rel (0) target = $region41
    $region40: #{tpu_custom_call.1} parent=1 // pred_region
      %89 = dma.done [#allocation6], 2048
    $region41: #{tpu_custom_call.1} parent=1 // pred_fallthru
      _
    // Predicated region
    $region42: #{tpu_custom_call.1} parent=1 // pred_check
      _
    $region43: #{tpu_custom_call.1} parent=1 // pred_check_branch
      %91 = sbr.rel (0) target = $region45
    $region44: #{tpu_custom_call.1} parent=1 // pred_region
      %92 = dma.done [#allocation6], 2048
    $region45: #{tpu_custom_call.1} parent=1 // pred_fallthru
      _
    // Predicated region
    $region46: #{tpu_custom_call.1} parent=1 // pred_check
      _
    $region47: #{tpu_custom_call.1} parent=1 // pred_check_branch
      %94 = sbr.rel (0) target = $region49
    $region48: #{tpu_custom_call.1} parent=1 // pred_region
      %95 = dma.done [#allocation9], 1024
    $region49: #{tpu_custom_call.1} parent=1 // pred_fallthru
      _
    // Predicated region
    $region50: #{tpu_custom_call.1} parent=1 // pred_check
      _
    $region51: #{tpu_custom_call.1} parent=1 // pred_check_branch
      %97 = sbr.rel (0) target = $region53
    $region52: #{tpu_custom_call.1} parent=1 // pred_region
      %98 = dma.done [#allocation9], 1024
    $region53: #{tpu_custom_call.1} parent=1 // pred_fallthru
      _
    %v100 = vld [vmem:[#allocation2] sm:$0xff]
    %v101 = vld [vmem:[#allocation2 + $0x8] sm:$0xff]
    %v102 = vld [vmem:[#allocation5] sm:$0xf]
    %v103 = vld [vmem:[#allocation5 + $0x4] sm:$0xf]
    %v104 = vld [vmem:[#allocation5 + $0x8] sm:$0xf]
    %v105 = vld [vmem:[#allocation5 + $0xc] sm:$0xf]
    %v106 = vld [vmem:[#allocation5 + $0x10] sm:$0xf]
    %v107 = vld [vmem:[#allocation5 + $0x14] sm:$0xf]
    %v108 = vld [vmem:[#allocation5 + $0x18] sm:$0xf]
    %v109 = vld [vmem:[#allocation5 + $0x1c] sm:$0xf]
    %v110 = vld [vmem:[#allocation5 + $0x20] sm:$0xf]
    %v111 = vld [vmem:[#allocation5 + $0x24] sm:$0xf]
    %v112 = vld [vmem:[#allocation5 + $0x28] sm:$0xf]
    %v113 = vld [vmem:[#allocation5 + $0x2c] sm:$0xf]
    %v114 = vld [vmem:[#allocation5 + $0x30] sm:$0xf]
    %v115 = vld [vmem:[#allocation5 + $0x34] sm:$0xf]
    %v116 = vld [vmem:[#allocation5 + $0x38] sm:$0xf]
    %v117 = vld [vmem:[#allocation5 + $0x3c] sm:$0xf]
    %v118 = vld [vmem:[#allocation5 + $0x40] sm:$0xf]
    %v119 = vld [vmem:[#allocation5 + $0x44] sm:$0xf]
    %v120 = vld [vmem:[#allocation5 + $0x48] sm:$0xf]
    %v121 = vld [vmem:[#allocation5 + $0x4c] sm:$0xf]
    %v122 = vld [vmem:[#allocation5 + $0x50] sm:$0xf]
    %v123 = vld [vmem:[#allocation5 + $0x54] sm:$0xf]
    %v124 = vld [vmem:[#allocation5 + $0x58] sm:$0xf]
    %v125 = vld [vmem:[#allocation5 + $0x5c] sm:$0xf]
    %v126 = vld [vmem:[#allocation5 + $0x60] sm:$0xf]
    %v127 = vld [vmem:[#allocation5 + $0x64] sm:$0xf]
    %v128 = vld [vmem:[#allocation5 + $0x68] sm:$0xf]
    %v129 = vld [vmem:[#allocation5 + $0x6c] sm:$0xf]
    %v130 = vld [vmem:[#allocation5 + $0x70] sm:$0xf]
    %v131 = vld [vmem:[#allocation5 + $0x74] sm:$0xf]
    %v132 = vld [vmem:[#allocation5 + $0x78] sm:$0xf]
    %v133 = vld [vmem:[#allocation5 + $0x7c] sm:$0xf]
    %v134 = vld [vmem:[#allocation7] sm:$0xff]
    %v135 = vld [vmem:[#allocation7 + $0x8] sm:$0xff]
    %v136 = vld [vmem:[#allocation7 + $0x10] sm:$0xff]
    %v137 = vld [vmem:[#allocation7 + $0x18] sm:$0xff]
    %v138 = vld [vmem:[#allocation7 + $0x20] sm:$0xff]
    %v139 = vld [vmem:[#allocation7 + $0x28] sm:$0xff]
    %v140 = vld [vmem:[#allocation7 + $0x30] sm:$0xff]
    %v141 = vld [vmem:[#allocation7 + $0x38] sm:$0xff]
    %v142 = vld [vmem:[#allocation7 + $0x40] sm:$0xff]
    %v143 = vld [vmem:[#allocation7 + $0x48] sm:$0xff]
    %v144 = vld [vmem:[#allocation7 + $0x50] sm:$0xff]
    %v145 = vld [vmem:[#allocation7 + $0x58] sm:$0xff]
    %v146 = vld [vmem:[#allocation7 + $0x60] sm:$0xff]
    %v147 = vld [vmem:[#allocation7 + $0x68] sm:$0xff]
    %v148 = vld [vmem:[#allocation7 + $0x70] sm:$0xff]
    %v149 = vld [vmem:[#allocation7 + $0x78] sm:$0xff]
    %v150 = vld [vmem:[#allocation8] sm:$0xf]
    %v151 = vld [vmem:[#allocation8 + $0x4] sm:$0xf]
    %v152 = vld [vmem:[#allocation8 + $0x8] sm:$0xf]
    %v153 = vld [vmem:[#allocation8 + $0xc] sm:$0xf]
    %v154 = vld [vmem:[#allocation8 + $0x10] sm:$0xf]
    %v155 = vld [vmem:[#allocation8 + $0x14] sm:$0xf]
    %v156 = vld [vmem:[#allocation8 + $0x18] sm:$0xf]
    %v157 = vld [vmem:[#allocation8 + $0x1c] sm:$0xf]
    %v158 = vld [vmem:[#allocation8 + $0x20] sm:$0xf]
    %v159 = vld [vmem:[#allocation8 + $0x24] sm:$0xf]
    %v160 = vld [vmem:[#allocation8 + $0x28] sm:$0xf]
    %v161 = vld [vmem:[#allocation8 + $0x2c] sm:$0xf]
    %v162 = vld [vmem:[#allocation8 + $0x30] sm:$0xf]
    %v163 = vld [vmem:[#allocation8 + $0x34] sm:$0xf]
    %v164 = vld [vmem:[#allocation8 + $0x38] sm:$0xf]
    %v165 = vld [vmem:[#allocation8 + $0x3c] sm:$0xf]
    %v166 = vld [vmem:[#allocation10] sm:$0xf]
    %v167 = vld [vmem:[#allocation10 + $0x4] sm:$0xf]
    %v168 = vld [vmem:[#allocation10 + $0x8] sm:$0xf]
    %v169 = vld [vmem:[#allocation10 + $0xc] sm:$0xf]
    %v170 = vld [vmem:[#allocation10 + $0x10] sm:$0xf]
    %v171 = vld [vmem:[#allocation10 + $0x14] sm:$0xf]
    %v172 = vld [vmem:[#allocation10 + $0x18] sm:$0xf]
    %v173 = vld [vmem:[#allocation10 + $0x1c] sm:$0xf]
    %v174 = vld [vmem:[#allocation10 + $0x20] sm:$0xf]
    %v175 = vld [vmem:[#allocation10 + $0x24] sm:$0xf]
    %v176 = vld [vmem:[#allocation10 + $0x28] sm:$0xf]
    %v177 = vld [vmem:[#allocation10 + $0x2c] sm:$0xf]
    %v178 = vld [vmem:[#allocation10 + $0x30] sm:$0xf]
    %v179 = vld [vmem:[#allocation10 + $0x34] sm:$0xf]
    %v180 = vld [vmem:[#allocation10 + $0x38] sm:$0xf]
    %v181 = vld [vmem:[#allocation10 + $0x3c] sm:$0xf]
    %v182 = vld [vmem:[%s4] sm:$0x1]
    %v183 = vld [vmem:[%s7] sm:$0x1]
    %v184 = vld [vmem:[%s1] sm:$0xff]
    %v185 = vlaneseq
    %v186 = vand.u32 %v185, 127
    %187 = vset.pattern.permute.xlu0 0
    %188 = vperm.xlu0 %187, %v184
    %v189 = vpop.permute.xlu0 %188
    %vm190 = vcmp.eq.s32.totalorder %v186, %v189
    %v191 = vpack.c.bf16 %v100, %v100
    %v192 = vpack.c.bf16 %v101, %v101
    %v194 = vlaneseq
    %v195 = vshrl.u32 %v194, 7
    %v196 = vsub.s32 0, %v195
    %v197 = vrot.slane %v182, %v196
    %v231 = vunpack.c.l.b16 %v102
    %v232 = vunpack.c.l.b16 %v103
    %v233 = vunpack.c.l.b16 %v104
    %v234 = vunpack.c.l.b16 %v105
    %v235 = vunpack.c.l.b16 %v106
    %v236 = vunpack.c.l.b16 %v107
    %v237 = vunpack.c.l.b16 %v108
    %v238 = vunpack.c.l.b16 %v109
    %v239 = vunpack.c.l.b16 %v110
    %v240 = vunpack.c.l.b16 %v111
    %v241 = vunpack.c.l.b16 %v112
    %v242 = vunpack.c.l.b16 %v113
    %v243 = vunpack.c.l.b16 %v114
    %v244 = vunpack.c.l.b16 %v115
    %v245 = vunpack.c.l.b16 %v116
    %v246 = vunpack.c.l.b16 %v117
    %v247 = vunpack.c.l.b16 %v118
    %v248 = vunpack.c.l.b16 %v119
    %v249 = vunpack.c.l.b16 %v120
    %v250 = vunpack.c.l.b16 %v121
    %v251 = vunpack.c.l.b16 %v122
    %v252 = vunpack.c.l.b16 %v123
    %v253 = vunpack.c.l.b16 %v124
    %v254 = vunpack.c.l.b16 %v125
    %v255 = vunpack.c.l.b16 %v126
    %v256 = vunpack.c.l.b16 %v127
    %v257 = vunpack.c.l.b16 %v128
    %v258 = vunpack.c.l.b16 %v129
    %v259 = vunpack.c.l.b16 %v130
    %v260 = vunpack.c.l.b16 %v131
    %v261 = vunpack.c.l.b16 %v132
    %v262 = vunpack.c.l.b16 %v133
    %v263 = vpack.c.b16 %v232, %v231
    %v264 = vpack.c.b16 %v234, %v233
    %v265 = vpack.c.b16 %v236, %v235
    %v266 = vpack.c.b16 %v238, %v237
    %v267 = vpack.c.b16 %v240, %v239
    %v268 = vpack.c.b16 %v242, %v241
    %v269 = vpack.c.b16 %v244, %v243
    %v270 = vpack.c.b16 %v246, %v245
    %v271 = vpack.c.b16 %v248, %v247
    %v272 = vpack.c.b16 %v250, %v249
    %v273 = vpack.c.b16 %v252, %v251
    %v274 = vpack.c.b16 %v254, %v253
    %v275 = vpack.c.b16 %v256, %v255
    %v276 = vpack.c.b16 %v258, %v257
    %v277 = vpack.c.b16 %v260, %v259
    %v278 = vpack.c.b16 %v262, %v261
    %295 = vmatprep.subr.bf16.mxu0 0
    %296 = vmatpush1.bf16.msra.mxu0 %v263
    %297 = vmatprep.subr.bf16.mxu0 0
    %298 = vmatpush1.bf16.msra.mxu0 %v264
    %299 = vmatprep.subr.bf16.mxu0 0
    %300 = vmatpush1.bf16.msra.mxu0 %v265
    %301 = vmatprep.subr.bf16.mxu0 0
    %302 = vmatpush1.bf16.msra.mxu0 %v266
    %303 = vmatprep.subr.bf16.mxu0 0
    %304 = vmatpush1.bf16.msra.mxu0 %v267
    %305 = vmatprep.subr.bf16.mxu0 0
    %306 = vmatpush1.bf16.msra.mxu0 %v268
    %307 = vmatprep.subr.bf16.mxu0 0
    %308 = vmatpush1.bf16.msra.mxu0 %v269
    %309 = vmatprep.subr.bf16.mxu0 0
    %310 = vmatpush1.bf16.msra.mxu0 %v270
    %311 = vmatprep.subr.bf16.mxu0 0
    %312 = vmatpush1.bf16.msra.mxu0 %v271
    %313 = vmatprep.subr.bf16.mxu0 0
    %314 = vmatpush1.bf16.msra.mxu0 %v272
    %315 = vmatprep.subr.bf16.mxu0 0
    %316 = vmatpush1.bf16.msra.mxu0 %v273
    %317 = vmatprep.subr.bf16.mxu0 0
    %318 = vmatpush1.bf16.msra.mxu0 %v274
    %319 = vmatprep.subr.bf16.mxu0 0
    %320 = vmatpush1.bf16.msra.mxu0 %v275
    %321 = vmatprep.subr.bf16.mxu0 0
    %322 = vmatpush1.bf16.msra.mxu0 %v276
    %323 = vmatprep.subr.bf16.mxu0 0
    %324 = vmatpush1.bf16.msra.mxu0 %v277
    %325 = vmatprep.subr.bf16.mxu0 0
    %326 = vmatpush1.bf16.msra.mxu0 %v278
    %327 = vmatprep.mubr.bf16.mxu0 %v192
    %328 = vmatmul.mubr.bf16.gmra.mrb[0].mxu0 %v191
    %v329 = vpop.f32.mrb[0].mxu0
    %v330 = vadd.f32 %v197, %v329
    %v331 = vpop.f32.mrb[0].mxu0
    %v332 = vpop.f32.mrb[0].mxu0
    %v333 = vpop.f32.mrb[0].mxu0
    %334 = vdwg.mxu0
    %v335 = vmax.f32 %v330, 0.0
    %v336 = vpack.c.bf16 %v335, %v335
    %v338 = vlaneseq
    %v339 = vshrl.u32 %v338, 7
    %v340 = vsub.s32 0, %v339
    %v341 = vrot.slane %v183, %v340
    %v359 = vunpack.c.l.b16 %v150
    %v360 = vunpack.c.l.b16 %v151
    %v361 = vunpack.c.l.b16 %v152
    %v362 = vunpack.c.l.b16 %v153
    %v363 = vunpack.c.l.b16 %v154
    %v364 = vunpack.c.l.b16 %v155
    %v365 = vunpack.c.l.b16 %v156
    %v366 = vunpack.c.l.b16 %v157
    %v367 = vunpack.c.l.b16 %v158
    %v368 = vunpack.c.l.b16 %v159
    %v369 = vunpack.c.l.b16 %v160
    %v370 = vunpack.c.l.b16 %v161
    %v371 = vunpack.c.l.b16 %v162
    %v372 = vunpack.c.l.b16 %v163
    %v373 = vunpack.c.l.b16 %v164
    %v374 = vunpack.c.l.b16 %v165
    %v375 = vpack.c.b16 %v360, %v359
    %v376 = vpack.c.b16 %v362, %v361
    %v377 = vpack.c.b16 %v364, %v363
    %v378 = vpack.c.b16 %v366, %v365
    %v379 = vpack.c.b16 %v368, %v367
    %v380 = vpack.c.b16 %v370, %v369
    %v381 = vpack.c.b16 %v372, %v371
    %v382 = vpack.c.b16 %v374, %v373
    %391 = vmatprep.subr.bf16.mxu0 0
    %392 = vmatpush1.bf16.msra.mxu0 %v375
    %393 = vmatprep.subr.bf16.mxu0 0
    %394 = vmatpush1.bf16.msra.mxu0 %v376
    %395 = vmatprep.subr.bf16.mxu0 0
    %396 = vmatpush1.bf16.msra.mxu0 %v377
    %397 = vmatprep.subr.bf16.mxu0 0
    %398 = vmatpush1.bf16.msra.mxu0 %v378
    %399 = vmatprep.subr.bf16.mxu0 0
    %400 = vmatpush1.bf16.msra.mxu0 %v379
    %401 = vmatprep.subr.bf16.mxu0 0
    %402 = vmatpush1.bf16.msra.mxu0 %v380
    %403 = vmatprep.subr.bf16.mxu0 0
    %404 = vmatpush1.bf16.msra.mxu0 %v381
    %405 = vmatprep.subr.bf16.mxu0 0
    %406 = vmatpush1.bf16.msra.mxu0 %v382
    %407 = vmatprep.subr.bf16.mxu0 0
    %408 = vmatpush1.bf16.msra.mxu0 0
    %409 = vmatprep.subr.bf16.mxu0 0
    %410 = vmatpush1.bf16.msra.mxu0 0
    %411 = vmatprep.subr.bf16.mxu0 0
    %412 = vmatpush1.bf16.msra.mxu0 0
    %413 = vmatprep.subr.bf16.mxu0 0
    %414 = vmatpush1.bf16.msra.mxu0 0
    %415 = vmatprep.subr.bf16.mxu0 0
    %416 = vmatpush1.bf16.msra.mxu0 0
    %417 = vmatprep.subr.bf16.mxu0 0
    %418 = vmatpush1.bf16.msra.mxu0 0
    %419 = vmatprep.subr.bf16.mxu0 0
    %420 = vmatpush1.bf16.msra.mxu0 0
    %421 = vmatprep.subr.bf16.mxu0 0
    %422 = vmatpush1.bf16.msra.mxu0 0
    %423 = vmatprep.mubr.bf16.mxu0 0
    %424 = vmatmul.mubr.bf16.gmra.mrb[0].mxu0 %v336
    %v425 = vpop.f32.mrb[0].mxu0
    %v426 = vadd.f32 %v341, %v425
    %v427 = vpop.f32.mrb[0].mxu0
    %v428 = vpop.f32.mrb[0].mxu0
    %v429 = vpop.f32.mrb[0].mxu0
    %430 = vdwg.mxu0
    %431 = vmax.xlane.f32.xlu0 %v426
    %v432 = vpop.xlane.xlu0 %431
    %v433 = vsub.f32 %v426, %v432
    %v434 = vmul.f32 %v433, 1.442695
    %v435 = vpow.pop %v434
    %436 = vadd.xlane.f32.xlu0 %v435
    %v437 = vpop.xlane.xlu0 %436
    %v438 = vrcp.pop %v437
    %v439 = vmul.f32 %v435, %v438
    %v440 = vsub.f32 %v439, 1.0
    %v441 = vsel %vm190, %v440, %v439
    %v442 = vpack.c.bf16 %v441, %v441
    %v459 = vunpack.c.l.b16 %v166
    %v460 = vunpack.c.l.b16 %v167
    %v461 = vunpack.c.l.b16 %v168
    %v462 = vunpack.c.l.b16 %v169
    %v463 = vunpack.c.l.b16 %v170
    %v464 = vunpack.c.l.b16 %v171
    %v465 = vunpack.c.l.b16 %v172
    %v466 = vunpack.c.l.b16 %v173
    %v467 = vunpack.c.l.b16 %v174
    %v468 = vunpack.c.l.b16 %v175
    %v469 = vunpack.c.l.b16 %v176
    %v470 = vunpack.c.l.b16 %v177
    %v471 = vunpack.c.l.b16 %v178
    %v472 = vunpack.c.l.b16 %v179
    %v473 = vunpack.c.l.b16 %v180
    %v474 = vunpack.c.l.b16 %v181
    %v475 = vpack.c.b16 %v460, %v459
    %v476 = vpack.c.b16 %v462, %v461
    %v477 = vpack.c.b16 %v464, %v463
    %v478 = vpack.c.b16 %v466, %v465
    %v479 = vpack.c.b16 %v468, %v467
    %v480 = vpack.c.b16 %v470, %v469
    %v481 = vpack.c.b16 %v472, %v471
    %v482 = vpack.c.b16 %v474, %v473
    %491 = vmatprep.subr.bf16.mxu0 0
    %492 = vmatpush1.bf16.msra.mxu0 %v475
    %493 = vmatprep.subr.bf16.mxu0 0
    %494 = vmatpush1.bf16.msra.mxu0 %v476
    %495 = vmatprep.subr.bf16.mxu0 0
    %496 = vmatpush1.bf16.msra.mxu0 %v477
    %497 = vmatprep.subr.bf16.mxu0 0
    %498 = vmatpush1.bf16.msra.mxu0 %v478
    %499 = vmatprep.subr.bf16.mxu0 0
    %500 = vmatpush1.bf16.msra.mxu0 %v479
    %501 = vmatprep.subr.bf16.mxu0 0
    %502 = vmatpush1.bf16.msra.mxu0 %v480
    %503 = vmatprep.subr.bf16.mxu0 0
    %504 = vmatpush1.bf16.msra.mxu0 %v481
    %505 = vmatprep.subr.bf16.mxu0 0
    %506 = vmatpush1.bf16.msra.mxu0 %v482
    %507 = vmatprep.subr.bf16.mxu0 0
    %508 = vmatpush1.bf16.msra.mxu0 0
    %509 = vmatprep.subr.bf16.mxu0 0
    %510 = vmatpush1.bf16.msra.mxu0 0
    %511 = vmatprep.subr.bf16.mxu0 0
    %512 = vmatpush1.bf16.msra.mxu0 0
    %513 = vmatprep.subr.bf16.mxu0 0
    %514 = vmatpush1.bf16.msra.mxu0 0
    %515 = vmatprep.subr.bf16.mxu0 0
    %516 = vmatpush1.bf16.msra.mxu0 0
    %517 = vmatprep.subr.bf16.mxu0 0
    %518 = vmatpush1.bf16.msra.mxu0 0
    %519 = vmatprep.subr.bf16.mxu0 0
    %520 = vmatpush1.bf16.msra.mxu0 0
    %521 = vmatprep.subr.bf16.mxu0 0
    %522 = vmatpush1.bf16.msra.mxu0 0
    %523 = vmatprep.mubr.bf16.mxu0 0
    %524 = vmatmul.mubr.bf16.gmra.mrb[0].mxu0 %v442
    %v525 = vpop.f32.mrb[0].mxu0
    %v526 = vadd.f32 0.0, %v525
    %v527 = vpop.f32.mrb[0].mxu0
    %v528 = vpop.f32.mrb[0].mxu0
    %v529 = vpop.f32.mrb[0].mxu0
    %530 = vdwg.mxu0
    %vm531 = vcmp.gt.f32.partialorder %v330, 0.0
    %v532 = vsel %vm531, %v526, 0.0
    %v533 = vpack.c.bf16 %v532, %v532
    %v550 = vunpack.c.l.b16 %v134
    %v551 = vunpack.c.h.b16 %v134
    %v552 = vunpack.c.l.b16 %v135
    %v553 = vunpack.c.h.b16 %v135
    %v554 = vunpack.c.l.b16 %v136
    %v555 = vunpack.c.h.b16 %v136
    %v556 = vunpack.c.l.b16 %v137
    %v557 = vunpack.c.h.b16 %v137
    %v558 = vunpack.c.l.b16 %v138
    %v559 = vunpack.c.h.b16 %v138
    %v560 = vunpack.c.l.b16 %v139
    %v561 = vunpack.c.h.b16 %v139
    %v562 = vunpack.c.l.b16 %v140
    %v563 = vunpack.c.h.b16 %v140
    %v564 = vunpack.c.l.b16 %v141
    %v565 = vunpack.c.h.b16 %v141
    %v566 = vunpack.c.l.b16 %v142
    %v567 = vunpack.c.h.b16 %v142
    %v568 = vunpack.c.l.b16 %v143
    %v569 = vunpack.c.h.b16 %v143
    %v570 = vunpack.c.l.b16 %v144
    %v571 = vunpack.c.h.b16 %v144
    %v572 = vunpack.c.l.b16 %v145
    %v573 = vunpack.c.h.b16 %v145
    %v574 = vunpack.c.l.b16 %v146
    %v575 = vunpack.c.h.b16 %v146
    %v576 = vunpack.c.l.b16 %v147
    %v577 = vunpack.c.h.b16 %v147
    %v578 = vunpack.c.l.b16 %v148
    %v579 = vunpack.c.h.b16 %v148
    %v580 = vunpack.c.l.b16 %v149
    %v581 = vunpack.c.h.b16 %v149
    %v582 = vpack.c.b16 %v552, %v550
    %v583 = vpack.c.b16 %v553, %v551
    %v584 = vpack.c.b16 %v556, %v554
    %v585 = vpack.c.b16 %v557, %v555
    %v586 = vpack.c.b16 %v560, %v558
    %v587 = vpack.c.b16 %v561, %v559
    %v588 = vpack.c.b16 %v564, %v562
    %v589 = vpack.c.b16 %v565, %v563
    %v590 = vpack.c.b16 %v568, %v566
    %v591 = vpack.c.b16 %v569, %v567
    %v592 = vpack.c.b16 %v572, %v570
    %v593 = vpack.c.b16 %v573, %v571
    %v594 = vpack.c.b16 %v576, %v574
    %v595 = vpack.c.b16 %v577, %v575
    %v596 = vpack.c.b16 %v580, %v578
    %v597 = vpack.c.b16 %v581, %v579
    %614 = vmatprep.subr.bf16.mxu0 %v583
    %615 = vmatpush1.bf16.msra.mxu0 %v582
    %616 = vmatprep.subr.bf16.mxu0 %v585
    %617 = vmatpush1.bf16.msra.mxu0 %v584
    %618 = vmatprep.subr.bf16.mxu0 %v587
    %619 = vmatpush1.bf16.msra.mxu0 %v586
    %620 = vmatprep.subr.bf16.mxu0 %v589
    %621 = vmatpush1.bf16.msra.mxu0 %v588
    %622 = vmatprep.subr.bf16.mxu0 %v591
    %623 = vmatpush1.bf16.msra.mxu0 %v590
    %624 = vmatprep.subr.bf16.mxu0 %v593
    %625 = vmatpush1.bf16.msra.mxu0 %v592
    %626 = vmatprep.subr.bf16.mxu0 %v595
    %627 = vmatpush1.bf16.msra.mxu0 %v594
    %628 = vmatprep.subr.bf16.mxu0 %v597
    %629 = vmatpush1.bf16.msra.mxu0 %v596
    %630 = vmatprep.subr.bf16.mxu0 0
    %631 = vmatpush1.bf16.msra.mxu0 0
    %632 = vmatprep.subr.bf16.mxu0 0
    %633 = vmatpush1.bf16.msra.mxu0 0
    %634 = vmatprep.subr.bf16.mxu0 0
    %635 = vmatpush1.bf16.msra.mxu0 0
    %636 = vmatprep.subr.bf16.mxu0 0
    %637 = vmatpush1.bf16.msra.mxu0 0
    %638 = vmatprep.subr.bf16.mxu0 0
    %639 = vmatpush1.bf16.msra.mxu0 0
    %640 = vmatprep.subr.bf16.mxu0 0
    %641 = vmatpush1.bf16.msra.mxu0 0
    %642 = vmatprep.subr.bf16.mxu0 0
    %643 = vmatpush1.bf16.msra.mxu0 0
    %644 = vmatprep.subr.bf16.mxu0 0
    %645 = vmatpush1.bf16.msra.mxu0 0
    %646 = vmatprep.mubr.bf16.mxu0 0
    %647 = vmatmul.mubr.bf16.gmra.mrb[0].mxu0 %v533
    %v648 = vpop.f32.mrb[0].mxu0
    %v649 = vadd.f32 0.0, %v648
    %v650 = vpop.f32.mrb[0].mxu0
    %v651 = vadd.f32 0.0, %v650
    %v652 = vpop.f32.mrb[0].mxu0
    %v653 = vpop.f32.mrb[0].mxu0
    %654 = vdwg.mxu0
    %v655 = vmul.f32 %v649, %v649
    %v656 = vmul.f32 %v651, %v651
    %v657 = vadd.f32 %v655, %v656
    %658 = vadd.xlane.f32.xlu0 %v657
    %v659 = vpop.xlane.xlu0 %658
    %v660 = vadd.f32 %v659, 1e-18
    %v661 = vrsqrt.pop %v660
    %v662 = vmul.f32 %v649, %v661
    %v663 = vmul.f32 %v651, %v661
    %v664 = vmul.f32 %v662, 0.25
    %v665 = vmul.f32 %v663, 0.25
    %v666 = vadd.f32 %v100, %v664
    %v667 = vadd.f32 %v101, %v665
    %v668 = vsub.f32 %v666, %v100
    %v669 = vsub.f32 %v667, %v101
    %v670 = vmul.f32 %v668, %v668
    %v671 = vmul.f32 %v669, %v669
    %v672 = vadd.f32 %v670, %v671
    %673 = vadd.xlane.f32.xlu0 %v672
    %v674 = vpop.xlane.xlu0 %673
    %v675 = vadd.f32 %v674, 1e-18
    %v676 = vrsqrt.pop %v675
    %v677 = vmul.f32 %v668, %v676
    %v678 = vmul.f32 %v669, %v676
    %v679 = vadd.f32 %v100, %v677
    %v680 = vadd.f32 %v101, %v678
    %v681 = vmax.f32 %v679, 0.0
    %v682 = vmax.f32 %v680, 0.0
    %v683 = vmin.f32 %v681, 1.0
    %v684 = vmin.f32 %v682, 1.0
    %v685 = vpack.c.bf16 %v683, %v683
    %v686 = vpack.c.bf16 %v684, %v684
    %687 = vmatprep.subr.bf16.mxu0 0
    %688 = vmatpush1.bf16.msra.mxu0 %v263
    %689 = vmatprep.subr.bf16.mxu0 0
    %690 = vmatpush1.bf16.msra.mxu0 %v264
    %691 = vmatprep.subr.bf16.mxu0 0
    %692 = vmatpush1.bf16.msra.mxu0 %v265
    %693 = vmatprep.subr.bf16.mxu0 0
    %694 = vmatpush1.bf16.msra.mxu0 %v266
    %695 = vmatprep.subr.bf16.mxu0 0
    %696 = vmatpush1.bf16.msra.mxu0 %v267
    %697 = vmatprep.subr.bf16.mxu0 0
    %698 = vmatpush1.bf16.msra.mxu0 %v268
    %699 = vmatprep.subr.bf16.mxu0 0
    %700 = vmatpush1.bf16.msra.mxu0 %v269
    %701 = vmatprep.subr.bf16.mxu0 0
    %702 = vmatpush1.bf16.msra.mxu0 %v270
    %703 = vmatprep.subr.bf16.mxu0 0
    %704 = vmatpush1.bf16.msra.mxu0 %v271
    %705 = vmatprep.subr.bf16.mxu0 0
    %706 = vmatpush1.bf16.msra.mxu0 %v272
    %707 = vmatprep.subr.bf16.mxu0 0
    %708 = vmatpush1.bf16.msra.mxu0 %v273
    %709 = vmatprep.subr.bf16.mxu0 0
    %710 = vmatpush1.bf16.msra.mxu0 %v274
    %711 = vmatprep.subr.bf16.mxu0 0
    %712 = vmatpush1.bf16.msra.mxu0 %v275
    %713 = vmatprep.subr.bf16.mxu0 0
    %714 = vmatpush1.bf16.msra.mxu0 %v276
    %715 = vmatprep.subr.bf16.mxu0 0
    %716 = vmatpush1.bf16.msra.mxu0 %v277
    %717 = vmatprep.subr.bf16.mxu0 0
    %718 = vmatpush1.bf16.msra.mxu0 %v278
    %719 = vmatprep.mubr.bf16.mxu0 %v686
    %720 = vmatmul.mubr.bf16.gmra.mrb[0].mxu0 %v685
    %v721 = vpop.f32.mrb[0].mxu0
    %v722 = vadd.f32 %v197, %v721
    %v723 = vpop.f32.mrb[0].mxu0
    %v724 = vpop.f32.mrb[0].mxu0
    %v725 = vpop.f32.mrb[0].mxu0
    %726 = vdwg.mxu0
    %v727 = vmax.f32 %v722, 0.0
    %v728 = vpack.c.bf16 %v727, %v727
    %729 = vmatprep.subr.bf16.mxu0 0
    %730 = vmatpush1.bf16.msra.mxu0 %v375
    %731 = vmatprep.subr.bf16.mxu0 0
    %732 = vmatpush1.bf16.msra.mxu0 %v376
    %733 = vmatprep.subr.bf16.mxu0 0
    %734 = vmatpush1.bf16.msra.mxu0 %v377
    %735 = vmatprep.subr.bf16.mxu0 0
    %736 = vmatpush1.bf16.msra.mxu0 %v378
    %737 = vmatprep.subr.bf16.mxu0 0
    %738 = vmatpush1.bf16.msra.mxu0 %v379
    %739 = vmatprep.subr.bf16.mxu0 0
    %740 = vmatpush1.bf16.msra.mxu0 %v380
    %741 = vmatprep.subr.bf16.mxu0 0
    %742 = vmatpush1.bf16.msra.mxu0 %v381
    %743 = vmatprep.subr.bf16.mxu0 0
    %744 = vmatpush1.bf16.msra.mxu0 %v382
    %745 = vmatprep.subr.bf16.mxu0 0
    %746 = vmatpush1.bf16.msra.mxu0 0
    %747 = vmatprep.subr.bf16.mxu0 0
    %748 = vmatpush1.bf16.msra.mxu0 0
    %749 = vmatprep.subr.bf16.mxu0 0
    %750 = vmatpush1.bf16.msra.mxu0 0
    %751 = vmatprep.subr.bf16.mxu0 0
    %752 = vmatpush1.bf16.msra.mxu0 0
    %753 = vmatprep.subr.bf16.mxu0 0
    %754 = vmatpush1.bf16.msra.mxu0 0
    %755 = vmatprep.subr.bf16.mxu0 0
    %756 = vmatpush1.bf16.msra.mxu0 0
    %757 = vmatprep.subr.bf16.mxu0 0
    %758 = vmatpush1.bf16.msra.mxu0 0
    %759 = vmatprep.subr.bf16.mxu0 0
    %760 = vmatpush1.bf16.msra.mxu0 0
    %761 = vmatprep.mubr.bf16.mxu0 0
    %762 = vmatmul.mubr.bf16.gmra.mrb[0].mxu0 %v728
    %v763 = vpop.f32.mrb[0].mxu0
    %v764 = vadd.f32 %v341, %v763
    %v765 = vpop.f32.mrb[0].mxu0
    %v766 = vpop.f32.mrb[0].mxu0
    %v767 = vpop.f32.mrb[0].mxu0
    %768 = vdwg.mxu0
    %769 = vmax.xlane.f32.xlu0 %v764
    %v770 = vpop.xlane.xlu0 %769
    %v771 = vsub.f32 %v764, %v770
    %v772 = vmul.f32 %v771, 1.442695
    %v773 = vpow.pop %v772
    %774 = vadd.xlane.f32.xlu0 %v773
    %v775 = vpop.xlane.xlu0 %774
    %v776 = vrcp.pop %v775
    %v777 = vmul.f32 %v773, %v776
    %v778 = vsub.f32 %v777, 1.0
    %v779 = vsel %vm190, %v778, %v777
    %v780 = vpack.c.bf16 %v779, %v779
    %781 = vmatprep.subr.bf16.mxu0 0
    %782 = vmatpush1.bf16.msra.mxu0 %v475
    %783 = vmatprep.subr.bf16.mxu0 0
    %784 = vmatpush1.bf16.msra.mxu0 %v476
    %785 = vmatprep.subr.bf16.mxu0 0
    %786 = vmatpush1.bf16.msra.mxu0 %v477
    %787 = vmatprep.subr.bf16.mxu0 0
    %788 = vmatpush1.bf16.msra.mxu0 %v478
    %789 = vmatprep.subr.bf16.mxu0 0
    %790 = vmatpush1.bf16.msra.mxu0 %v479
    %791 = vmatprep.subr.bf16.mxu0 0
    %792 = vmatpush1.bf16.msra.mxu0 %v480
    %793 = vmatprep.subr.bf16.mxu0 0
    %794 = vmatpush1.bf16.msra.mxu0 %v481
    %795 = vmatprep.subr.bf16.mxu0 0
    %796 = vmatpush1.bf16.msra.mxu0 %v482
    %797 = vmatprep.subr.bf16.mxu0 0
    %798 = vmatpush1.bf16.msra.mxu0 0
    %799 = vmatprep.subr.bf16.mxu0 0
    %800 = vmatpush1.bf16.msra.mxu0 0
    %801 = vmatprep.subr.bf16.mxu0 0
    %802 = vmatpush1.bf16.msra.mxu0 0
    %803 = vmatprep.subr.bf16.mxu0 0
    %804 = vmatpush1.bf16.msra.mxu0 0
    %805 = vmatprep.subr.bf16.mxu0 0
    %806 = vmatpush1.bf16.msra.mxu0 0
    %807 = vmatprep.subr.bf16.mxu0 0
    %808 = vmatpush1.bf16.msra.mxu0 0
    %809 = vmatprep.subr.bf16.mxu0 0
    %810 = vmatpush1.bf16.msra.mxu0 0
    %811 = vmatprep.subr.bf16.mxu0 0
    %812 = vmatpush1.bf16.msra.mxu0 0
    %813 = vmatprep.mubr.bf16.mxu0 0
    %814 = vmatmul.mubr.bf16.gmra.mrb[0].mxu0 %v780
    %v815 = vpop.f32.mrb[0].mxu0
    %v816 = vadd.f32 0.0, %v815
    %v817 = vpop.f32.mrb[0].mxu0
    %v818 = vpop.f32.mrb[0].mxu0
    %v819 = vpop.f32.mrb[0].mxu0
    %820 = vdwg.mxu0
    %vm821 = vcmp.gt.f32.partialorder %v722, 0.0
    %v822 = vsel %vm821, %v816, 0.0
    %v823 = vpack.c.bf16 %v822, %v822
    %824 = vmatprep.subr.bf16.mxu0 %v583
    %825 = vmatpush1.bf16.msra.mxu0 %v582
    %826 = vmatprep.subr.bf16.mxu0 %v585
    %827 = vmatpush1.bf16.msra.mxu0 %v584
    %828 = vmatprep.subr.bf16.mxu0 %v587
    %829 = vmatpush1.bf16.msra.mxu0 %v586
    %830 = vmatprep.subr.bf16.mxu0 %v589
    %831 = vmatpush1.bf16.msra.mxu0 %v588
    %832 = vmatprep.subr.bf16.mxu0 %v591
    %833 = vmatpush1.bf16.msra.mxu0 %v590
    %834 = vmatprep.subr.bf16.mxu0 %v593
    %835 = vmatpush1.bf16.msra.mxu0 %v592
    %836 = vmatprep.subr.bf16.mxu0 %v595
    %837 = vmatpush1.bf16.msra.mxu0 %v594
    %838 = vmatprep.subr.bf16.mxu0 %v597
    %839 = vmatpush1.bf16.msra.mxu0 %v596
    %840 = vmatprep.subr.bf16.mxu0 0
    %841 = vmatpush1.bf16.msra.mxu0 0
    %842 = vmatprep.subr.bf16.mxu0 0
    %843 = vmatpush1.bf16.msra.mxu0 0
    %844 = vmatprep.subr.bf16.mxu0 0
    %845 = vmatpush1.bf16.msra.mxu0 0
    %846 = vmatprep.subr.bf16.mxu0 0
    %847 = vmatpush1.bf16.msra.mxu0 0
    %848 = vmatprep.subr.bf16.mxu0 0
    %849 = vmatpush1.bf16.msra.mxu0 0
    %850 = vmatprep.subr.bf16.mxu0 0
    %851 = vmatpush1.bf16.msra.mxu0 0
    %852 = vmatprep.subr.bf16.mxu0 0
    %853 = vmatpush1.bf16.msra.mxu0 0
    %854 = vmatprep.subr.bf16.mxu0 0
    %855 = vmatpush1.bf16.msra.mxu0 0
    %856 = vmatprep.mubr.bf16.mxu0 0
    %857 = vmatmul.mubr.bf16.gmra.mrb[0].mxu0 %v823
    %v858 = vpop.f32.mrb[0].mxu0
    %v859 = vadd.f32 0.0, %v858
    %v860 = vpop.f32.mrb[0].mxu0
    %v861 = vadd.f32 0.0, %v860
    %v862 = vpop.f32.mrb[0].mxu0
    %v863 = vpop.f32.mrb[0].mxu0
    %864 = vdwg.mxu0
    %v865 = vmul.f32 %v859, %v859
    %v866 = vmul.f32 %v861, %v861
    %v867 = vadd.f32 %v865, %v866
    %868 = vadd.xlane.f32.xlu0 %v867
    %v869 = vpop.xlane.xlu0 %868
    %v870 = vadd.f32 %v869, 1e-18
    %v871 = vrsqrt.pop %v870
    %v872 = vmul.f32 %v859, %v871
    %v873 = vmul.f32 %v861, %v871
    %v874 = vmul.f32 %v872, 0.25
    %v875 = vmul.f32 %v873, 0.25
    %v876 = vadd.f32 %v683, %v874
    %v877 = vadd.f32 %v684, %v875
    %v878 = vsub.f32 %v876, %v100
    %v879 = vsub.f32 %v877, %v101
    %v880 = vmul.f32 %v878, %v878
    %v881 = vmul.f32 %v879, %v879
    %v882 = vadd.f32 %v880, %v881
    %883 = vadd.xlane.f32.xlu0 %v882
    %v884 = vpop.xlane.xlu0 %883
    %v885 = vadd.f32 %v884, 1e-18
    %v886 = vrsqrt.pop %v885
    %v887 = vmul.f32 %v878, %v886
    %v888 = vmul.f32 %v879, %v886
    %v889 = vadd.f32 %v100, %v887
    %v890 = vadd.f32 %v101, %v888
    %v891 = vmax.f32 %v889, 0.0
    %v892 = vmax.f32 %v890, 0.0
    %v893 = vmin.f32 %v891, 1.0
    %v894 = vmin.f32 %v892, 1.0
    %v895 = vpack.c.bf16 %v893, %v893
    %v896 = vpack.c.bf16 %v894, %v894
    %897 = vmatprep.subr.bf16.mxu0 0
    %898 = vmatpush1.bf16.msra.mxu0 %v263
    %899 = vmatprep.subr.bf16.mxu0 0
    %900 = vmatpush1.bf16.msra.mxu0 %v264
    %901 = vmatprep.subr.bf16.mxu0 0
    %902 = vmatpush1.bf16.msra.mxu0 %v265
    %903 = vmatprep.subr.bf16.mxu0 0
    %904 = vmatpush1.bf16.msra.mxu0 %v266
    %905 = vmatprep.subr.bf16.mxu0 0
    %906 = vmatpush1.bf16.msra.mxu0 %v267
    %907 = vmatprep.subr.bf16.mxu0 0
    %908 = vmatpush1.bf16.msra.mxu0 %v268
    %909 = vmatprep.subr.bf16.mxu0 0
    %910 = vmatpush1.bf16.msra.mxu0 %v269
    %911 = vmatprep.subr.bf16.mxu0 0
    %912 = vmatpush1.bf16.msra.mxu0 %v270
    %913 = vmatprep.subr.bf16.mxu0 0
    %914 = vmatpush1.bf16.msra.mxu0 %v271
    %915 = vmatprep.subr.bf16.mxu0 0
    %916 = vmatpush1.bf16.msra.mxu0 %v272
    %917 = vmatprep.subr.bf16.mxu0 0
    %918 = vmatpush1.bf16.msra.mxu0 %v273
    %919 = vmatprep.subr.bf16.mxu0 0
    %920 = vmatpush1.bf16.msra.mxu0 %v274
    %921 = vmatprep.subr.bf16.mxu0 0
    %922 = vmatpush1.bf16.msra.mxu0 %v275
    %923 = vmatprep.subr.bf16.mxu0 0
    %924 = vmatpush1.bf16.msra.mxu0 %v276
    %925 = vmatprep.subr.bf16.mxu0 0
    %926 = vmatpush1.bf16.msra.mxu0 %v277
    %927 = vmatprep.subr.bf16.mxu0 0
    %928 = vmatpush1.bf16.msra.mxu0 %v278
    %929 = vmatprep.mubr.bf16.mxu0 %v896
    %930 = vmatmul.mubr.bf16.gmra.mrb[0].mxu0 %v895
    %v931 = vpop.f32.mrb[0].mxu0
    %v932 = vadd.f32 %v197, %v931
    %v933 = vpop.f32.mrb[0].mxu0
    %v934 = vpop.f32.mrb[0].mxu0
    %v935 = vpop.f32.mrb[0].mxu0
    %936 = vdwg.mxu0
    %v937 = vmax.f32 %v932, 0.0
    %v938 = vpack.c.bf16 %v937, %v937
    %939 = vmatprep.subr.bf16.mxu0 0
    %940 = vmatpush1.bf16.msra.mxu0 %v375
    %941 = vmatprep.subr.bf16.mxu0 0
    %942 = vmatpush1.bf16.msra.mxu0 %v376
    %943 = vmatprep.subr.bf16.mxu0 0
    %944 = vmatpush1.bf16.msra.mxu0 %v377
    %945 = vmatprep.subr.bf16.mxu0 0
    %946 = vmatpush1.bf16.msra.mxu0 %v378
    %947 = vmatprep.subr.bf16.mxu0 0
    %948 = vmatpush1.bf16.msra.mxu0 %v379
    %949 = vmatprep.subr.bf16.mxu0 0
    %950 = vmatpush1.bf16.msra.mxu0 %v380
    %951 = vmatprep.subr.bf16.mxu0 0
    %952 = vmatpush1.bf16.msra.mxu0 %v381
    %953 = vmatprep.subr.bf16.mxu0 0
    %954 = vmatpush1.bf16.msra.mxu0 %v382
    %955 = vmatprep.subr.bf16.mxu0 0
    %956 = vmatpush1.bf16.msra.mxu0 0
    %957 = vmatprep.subr.bf16.mxu0 0
    %958 = vmatpush1.bf16.msra.mxu0 0
    %959 = vmatprep.subr.bf16.mxu0 0
    %960 = vmatpush1.bf16.msra.mxu0 0
    %961 = vmatprep.subr.bf16.mxu0 0
    %962 = vmatpush1.bf16.msra.mxu0 0
    %963 = vmatprep.subr.bf16.mxu0 0
    %964 = vmatpush1.bf16.msra.mxu0 0
    %965 = vmatprep.subr.bf16.mxu0 0
    %966 = vmatpush1.bf16.msra.mxu0 0
    %967 = vmatprep.subr.bf16.mxu0 0
    %968 = vmatpush1.bf16.msra.mxu0 0
    %969 = vmatprep.subr.bf16.mxu0 0
    %970 = vmatpush1.bf16.msra.mxu0 0
    %971 = vmatprep.mubr.bf16.mxu0 0
    %972 = vmatmul.mubr.bf16.gmra.mrb[0].mxu0 %v938
    %v973 = vpop.f32.mrb[0].mxu0
    %v974 = vadd.f32 %v341, %v973
    %v975 = vpop.f32.mrb[0].mxu0
    %v976 = vpop.f32.mrb[0].mxu0
    %v977 = vpop.f32.mrb[0].mxu0
    %978 = vdwg.mxu0
    %979 = vmax.xlane.f32.xlu0 %v974
    %v980 = vpop.xlane.xlu0 %979
    %v981 = vsub.f32 %v974, %v980
    %v982 = vmul.f32 %v981, 1.442695
    %v983 = vpow.pop %v982
    %984 = vadd.xlane.f32.xlu0 %v983
    %v985 = vpop.xlane.xlu0 %984
    %v986 = vrcp.pop %v985
    %v987 = vmul.f32 %v983, %v986
    %v988 = vsub.f32 %v987, 1.0
    %v989 = vsel %vm190, %v988, %v987
    %v990 = vpack.c.bf16 %v989, %v989
    %991 = vmatprep.subr.bf16.mxu0 0
    %992 = vmatpush1.bf16.msra.mxu0 %v475
    %993 = vmatprep.subr.bf16.mxu0 0
    %994 = vmatpush1.bf16.msra.mxu0 %v476
    %995 = vmatprep.subr.bf16.mxu0 0
    %996 = vmatpush1.bf16.msra.mxu0 %v477
    %997 = vmatprep.subr.bf16.mxu0 0
    %998 = vmatpush1.bf16.msra.mxu0 %v478
    %999 = vmatprep.subr.bf16.mxu0 0
    %1000 = vmatpush1.bf16.msra.mxu0 %v479
    %1001 = vmatprep.subr.bf16.mxu0 0
    %1002 = vmatpush1.bf16.msra.mxu0 %v480
    %1003 = vmatprep.subr.bf16.mxu0 0
    %1004 = vmatpush1.bf16.msra.mxu0 %v481
    %1005 = vmatprep.subr.bf16.mxu0 0
    %1006 = vmatpush1.bf16.msra.mxu0 %v482
    %1007 = vmatprep.subr.bf16.mxu0 0
    %1008 = vmatpush1.bf16.msra.mxu0 0
    %1009 = vmatprep.subr.bf16.mxu0 0
    %1010 = vmatpush1.bf16.msra.mxu0 0
    %1011 = vmatprep.subr.bf16.mxu0 0
    %1012 = vmatpush1.bf16.msra.mxu0 0
    %1013 = vmatprep.subr.bf16.mxu0 0
    %1014 = vmatpush1.bf16.msra.mxu0 0
    %1015 = vmatprep.subr.bf16.mxu0 0
    %1016 = vmatpush1.bf16.msra.mxu0 0
    %1017 = vmatprep.subr.bf16.mxu0 0
    %1018 = vmatpush1.bf16.msra.mxu0 0
    %1019 = vmatprep.subr.bf16.mxu0 0
    %1020 = vmatpush1.bf16.msra.mxu0 0
    %1021 = vmatprep.subr.bf16.mxu0 0
    %1022 = vmatpush1.bf16.msra.mxu0 0
    %1023 = vmatprep.mubr.bf16.mxu0 0
    %1024 = vmatmul.mubr.bf16.gmra.mrb[0].mxu0 %v990
    %v1025 = vpop.f32.mrb[0].mxu0
    %v1026 = vadd.f32 0.0, %v1025
    %v1027 = vpop.f32.mrb[0].mxu0
    %v1028 = vpop.f32.mrb[0].mxu0
    %v1029 = vpop.f32.mrb[0].mxu0
    %1030 = vdwg.mxu0
    %vm1031 = vcmp.gt.f32.partialorder %v932, 0.0
    %v1032 = vsel %vm1031, %v1026, 0.0
    %v1033 = vpack.c.bf16 %v1032, %v1032
    %1034 = vmatprep.subr.bf16.mxu0 %v583
    %1035 = vmatpush1.bf16.msra.mxu0 %v582
    %1036 = vmatprep.subr.bf16.mxu0 %v585
    %1037 = vmatpush1.bf16.msra.mxu0 %v584
    %1038 = vmatprep.subr.bf16.mxu0 %v587
    %1039 = vmatpush1.bf16.msra.mxu0 %v586
    %1040 = vmatprep.subr.bf16.mxu0 %v589
    %1041 = vmatpush1.bf16.msra.mxu0 %v588
    %1042 = vmatprep.subr.bf16.mxu0 %v591
    %1043 = vmatpush1.bf16.msra.mxu0 %v590
    %1044 = vmatprep.subr.bf16.mxu0 %v593
    %1045 = vmatpush1.bf16.msra.mxu0 %v592
    %1046 = vmatprep.subr.bf16.mxu0 %v595
    %1047 = vmatpush1.bf16.msra.mxu0 %v594
    %1048 = vmatprep.subr.bf16.mxu0 %v597
    %1049 = vmatpush1.bf16.msra.mxu0 %v596
    %1050 = vmatprep.subr.bf16.mxu0 0
    %1051 = vmatpush1.bf16.msra.mxu0 0
    %1052 = vmatprep.subr.bf16.mxu0 0
    %1053 = vmatpush1.bf16.msra.mxu0 0
    %1054 = vmatprep.subr.bf16.mxu0 0
    %1055 = vmatpush1.bf16.msra.mxu0 0
    %1056 = vmatprep.subr.bf16.mxu0 0
    %1057 = vmatpush1.bf16.msra.mxu0 0
    %1058 = vmatprep.subr.bf16.mxu0 0
    %1059 = vmatpush1.bf16.msra.mxu0 0
    %1060 = vmatprep.subr.bf16.mxu0 0
    %1061 = vmatpush1.bf16.msra.mxu0 0
    %1062 = vmatprep.subr.bf16.mxu0 0
    %1063 = vmatpush1.bf16.msra.mxu0 0
    %1064 = vmatprep.subr.bf16.mxu0 0
    %1065 = vmatpush1.bf16.msra.mxu0 0
    %1066 = vmatprep.mubr.bf16.mxu0 0
    %1067 = vmatmul.mubr.bf16.gmra.mrb[0].mxu0 %v1033
    %v1068 = vpop.f32.mrb[0].mxu0
    %v1069 = vadd.f32 0.0, %v1068
    %v1070 = vpop.f32.mrb[0].mxu0
    %v1071 = vadd.f32 0.0, %v1070
    %v1072 = vpop.f32.mrb[0].mxu0
    %v1073 = vpop.f32.mrb[0].mxu0
    %1074 = vdwg.mxu0
    %v1075 = vmul.f32 %v1069, %v1069
    %v1076 = vmul.f32 %v1071, %v1071
    %v1077 = vadd.f32 %v1075, %v1076
    %1078 = vadd.xlane.f32.xlu0 %v1077
    %v1079 = vpop.xlane.xlu0 %1078
    %v1080 = vadd.f32 %v1079, 1e-18
    %v1081 = vrsqrt.pop %v1080
    %v1082 = vmul.f32 %v1069, %v1081
    %v1083 = vmul.f32 %v1071, %v1081
    %v1084 = vmul.f32 %v1082, 0.25
    %v1085 = vmul.f32 %v1083, 0.25
    %v1086 = vadd.f32 %v893, %v1084
    %v1087 = vadd.f32 %v894, %v1085
    %v1088 = vsub.f32 %v1086, %v100
    %v1089 = vsub.f32 %v1087, %v101
    %v1090 = vmul.f32 %v1088, %v1088
    %v1091 = vmul.f32 %v1089, %v1089
    %v1092 = vadd.f32 %v1090, %v1091
    %1093 = vadd.xlane.f32.xlu0 %v1092
    %v1094 = vpop.xlane.xlu0 %1093
    %v1095 = vadd.f32 %v1094, 1e-18
    %v1096 = vrsqrt.pop %v1095
    %v1097 = vmul.f32 %v1088, %v1096
    %v1098 = vmul.f32 %v1089, %v1096
    %v1099 = vadd.f32 %v100, %v1097
    %v1100 = vadd.f32 %v101, %v1098
    %v1101 = vmax.f32 %v1099, 0.0
    %v1102 = vmax.f32 %v1100, 0.0
    %v1103 = vmin.f32 %v1101, 1.0
    %v1104 = vmin.f32 %v1102, 1.0
    %v1105 = vpack.c.bf16 %v1103, %v1103
    %v1106 = vpack.c.bf16 %v1104, %v1104
    %1107 = vmatprep.subr.bf16.mxu0 0
    %1108 = vmatpush1.bf16.msra.mxu0 %v263
    %1109 = vmatprep.subr.bf16.mxu0 0
    %1110 = vmatpush1.bf16.msra.mxu0 %v264
    %1111 = vmatprep.subr.bf16.mxu0 0
    %1112 = vmatpush1.bf16.msra.mxu0 %v265
    %1113 = vmatprep.subr.bf16.mxu0 0
    %1114 = vmatpush1.bf16.msra.mxu0 %v266
    %1115 = vmatprep.subr.bf16.mxu0 0
    %1116 = vmatpush1.bf16.msra.mxu0 %v267
    %1117 = vmatprep.subr.bf16.mxu0 0
    %1118 = vmatpush1.bf16.msra.mxu0 %v268
    %1119 = vmatprep.subr.bf16.mxu0 0
    %1120 = vmatpush1.bf16.msra.mxu0 %v269
    %1121 = vmatprep.subr.bf16.mxu0 0
    %1122 = vmatpush1.bf16.msra.mxu0 %v270
    %1123 = vmatprep.subr.bf16.mxu0 0
    %1124 = vmatpush1.bf16.msra.mxu0 %v271
    %1125 = vmatprep.subr.bf16.mxu0 0
    %1126 = vmatpush1.bf16.msra.mxu0 %v272
    %1127 = vmatprep.subr.bf16.mxu0 0
    %1128 = vmatpush1.bf16.msra.mxu0 %v273
    %1129 = vmatprep.subr.bf16.mxu0 0
    %1130 = vmatpush1.bf16.msra.mxu0 %v274
    %1131 = vmatprep.subr.bf16.mxu0 0
    %1132 = vmatpush1.bf16.msra.mxu0 %v275
    %1133 = vmatprep.subr.bf16.mxu0 0
    %1134 = vmatpush1.bf16.msra.mxu0 %v276
    %1135 = vmatprep.subr.bf16.mxu0 0
    %1136 = vmatpush1.bf16.msra.mxu0 %v277
    %1137 = vmatprep.subr.bf16.mxu0 0
    %1138 = vmatpush1.bf16.msra.mxu0 %v278
    %1139 = vmatprep.mubr.bf16.mxu0 %v1106
    %1140 = vmatmul.mubr.bf16.gmra.mrb[0].mxu0 %v1105
    %v1141 = vpop.f32.mrb[0].mxu0
    %v1142 = vadd.f32 %v197, %v1141
    %v1143 = vpop.f32.mrb[0].mxu0
    %v1144 = vpop.f32.mrb[0].mxu0
    %v1145 = vpop.f32.mrb[0].mxu0
    %1146 = vdwg.mxu0
    %v1147 = vmax.f32 %v1142, 0.0
    %v1148 = vpack.c.bf16 %v1147, %v1147
    %1149 = vmatprep.subr.bf16.mxu0 0
    %1150 = vmatpush1.bf16.msra.mxu0 %v375
    %1151 = vmatprep.subr.bf16.mxu0 0
    %1152 = vmatpush1.bf16.msra.mxu0 %v376
    %1153 = vmatprep.subr.bf16.mxu0 0
    %1154 = vmatpush1.bf16.msra.mxu0 %v377
    %1155 = vmatprep.subr.bf16.mxu0 0
    %1156 = vmatpush1.bf16.msra.mxu0 %v378
    %1157 = vmatprep.subr.bf16.mxu0 0
    %1158 = vmatpush1.bf16.msra.mxu0 %v379
    %1159 = vmatprep.subr.bf16.mxu0 0
    %1160 = vmatpush1.bf16.msra.mxu0 %v380
    %1161 = vmatprep.subr.bf16.mxu0 0
    %1162 = vmatpush1.bf16.msra.mxu0 %v381
    %1163 = vmatprep.subr.bf16.mxu0 0
    %1164 = vmatpush1.bf16.msra.mxu0 %v382
    %1165 = vmatprep.subr.bf16.mxu0 0
    %1166 = vmatpush1.bf16.msra.mxu0 0
    %1167 = vmatprep.subr.bf16.mxu0 0
    %1168 = vmatpush1.bf16.msra.mxu0 0
    %1169 = vmatprep.subr.bf16.mxu0 0
    %1170 = vmatpush1.bf16.msra.mxu0 0
    %1171 = vmatprep.subr.bf16.mxu0 0
    %1172 = vmatpush1.bf16.msra.mxu0 0
    %1173 = vmatprep.subr.bf16.mxu0 0
    %1174 = vmatpush1.bf16.msra.mxu0 0
    %1175 = vmatprep.subr.bf16.mxu0 0
    %1176 = vmatpush1.bf16.msra.mxu0 0
    %1177 = vmatprep.subr.bf16.mxu0 0
    %1178 = vmatpush1.bf16.msra.mxu0 0
    %1179 = vmatprep.subr.bf16.mxu0 0
    %1180 = vmatpush1.bf16.msra.mxu0 0
    %1181 = vmatprep.mubr.bf16.mxu0 0
    %1182 = vmatmul.mubr.bf16.gmra.mrb[0].mxu0 %v1148
    %v1183 = vpop.f32.mrb[0].mxu0
    %v1184 = vadd.f32 %v341, %v1183
    %v1185 = vpop.f32.mrb[0].mxu0
    %v1186 = vpop.f32.mrb[0].mxu0
    %v1187 = vpop.f32.mrb[0].mxu0
    %1188 = vdwg.mxu0
    %1189 = vmax.xlane.f32.xlu0 %v1184
    %v1190 = vpop.xlane.xlu0 %1189
    %v1191 = vsub.f32 %v1184, %v1190
    %v1192 = vmul.f32 %v1191, 1.442695
    %v1193 = vpow.pop %v1192
    %1194 = vadd.xlane.f32.xlu0 %v1193
    %v1195 = vpop.xlane.xlu0 %1194
    %v1196 = vrcp.pop %v1195
    %v1197 = vmul.f32 %v1193, %v1196
    %v1198 = vsub.f32 %v1197, 1.0
    %v1199 = vsel %vm190, %v1198, %v1197
    %v1200 = vpack.c.bf16 %v1199, %v1199
    %1201 = vmatprep.subr.bf16.mxu0 0
    %1202 = vmatpush1.bf16.msra.mxu0 %v475
    %1203 = vmatprep.subr.bf16.mxu0 0
    %1204 = vmatpush1.bf16.msra.mxu0 %v476
    %1205 = vmatprep.subr.bf16.mxu0 0
    %1206 = vmatpush1.bf16.msra.mxu0 %v477
    %1207 = vmatprep.subr.bf16.mxu0 0
    %1208 = vmatpush1.bf16.msra.mxu0 %v478
    %1209 = vmatprep.subr.bf16.mxu0 0
    %1210 = vmatpush1.bf16.msra.mxu0 %v479
    %1211 = vmatprep.subr.bf16.mxu0 0
    %1212 = vmatpush1.bf16.msra.mxu0 %v480
    %1213 = vmatprep.subr.bf16.mxu0 0
    %1214 = vmatpush1.bf16.msra.mxu0 %v481
    %1215 = vmatprep.subr.bf16.mxu0 0
    %1216 = vmatpush1.bf16.msra.mxu0 %v482
    %1217 = vmatprep.subr.bf16.mxu0 0
    %1218 = vmatpush1.bf16.msra.mxu0 0
    %1219 = vmatprep.subr.bf16.mxu0 0
    %1220 = vmatpush1.bf16.msra.mxu0 0
    %1221 = vmatprep.subr.bf16.mxu0 0
    %1222 = vmatpush1.bf16.msra.mxu0 0
    %1223 = vmatprep.subr.bf16.mxu0 0
    %1224 = vmatpush1.bf16.msra.mxu0 0
    %1225 = vmatprep.subr.bf16.mxu0 0
    %1226 = vmatpush1.bf16.msra.mxu0 0
    %1227 = vmatprep.subr.bf16.mxu0 0
    %1228 = vmatpush1.bf16.msra.mxu0 0
    %1229 = vmatprep.subr.bf16.mxu0 0
    %1230 = vmatpush1.bf16.msra.mxu0 0
    %1231 = vmatprep.subr.bf16.mxu0 0
    %1232 = vmatpush1.bf16.msra.mxu0 0
    %1233 = vmatprep.mubr.bf16.mxu0 0
    %1234 = vmatmul.mubr.bf16.gmra.mrb[0].mxu0 %v1200
    %v1235 = vpop.f32.mrb[0].mxu0
    %v1236 = vadd.f32 0.0, %v1235
    %v1237 = vpop.f32.mrb[0].mxu0
    %v1238 = vpop.f32.mrb[0].mxu0
    %v1239 = vpop.f32.mrb[0].mxu0
    %1240 = vdwg.mxu0
    %vm1241 = vcmp.gt.f32.partialorder %v1142, 0.0
    %v1242 = vsel %vm1241, %v1236, 0.0
    %v1243 = vpack.c.bf16 %v1242, %v1242
    %1244 = vmatprep.subr.bf16.mxu0 %v583
    %1245 = vmatpush1.bf16.msra.mxu0 %v582
    %1246 = vmatprep.subr.bf16.mxu0 %v585
    %1247 = vmatpush1.bf16.msra.mxu0 %v584
    %1248 = vmatprep.subr.bf16.mxu0 %v587
    %1249 = vmatpush1.bf16.msra.mxu0 %v586
    %1250 = vmatprep.subr.bf16.mxu0 %v589
    %1251 = vmatpush1.bf16.msra.mxu0 %v588
    %1252 = vmatprep.subr.bf16.mxu0 %v591
    %1253 = vmatpush1.bf16.msra.mxu0 %v590
    %1254 = vmatprep.subr.bf16.mxu0 %v593
    %1255 = vmatpush1.bf16.msra.mxu0 %v592
    %1256 = vmatprep.subr.bf16.mxu0 %v595
    %1257 = vmatpush1.bf16.msra.mxu0 %v594
    %1258 = vmatprep.subr.bf16.mxu0 %v597
    %1259 = vmatpush1.bf16.msra.mxu0 %v596
    %1260 = vmatprep.subr.bf16.mxu0 0
    %1261 = vmatpush1.bf16.msra.mxu0 0
    %1262 = vmatprep.subr.bf16.mxu0 0
    %1263 = vmatpush1.bf16.msra.mxu0 0
    %1264 = vmatprep.subr.bf16.mxu0 0
    %1265 = vmatpush1.bf16.msra.mxu0 0
    %1266 = vmatprep.subr.bf16.mxu0 0
    %1267 = vmatpush1.bf16.msra.mxu0 0
    %1268 = vmatprep.subr.bf16.mxu0 0
    %1269 = vmatpush1.bf16.msra.mxu0 0
    %1270 = vmatprep.subr.bf16.mxu0 0
    %1271 = vmatpush1.bf16.msra.mxu0 0
    %1272 = vmatprep.subr.bf16.mxu0 0
    %1273 = vmatpush1.bf16.msra.mxu0 0
    %1274 = vmatprep.subr.bf16.mxu0 0
    %1275 = vmatpush1.bf16.msra.mxu0 0
    %1276 = vmatprep.mubr.bf16.mxu0 0
    %1277 = vmatmul.mubr.bf16.gmra.mrb[0].mxu0 %v1243
    %v1278 = vpop.f32.mrb[0].mxu0
    %v1279 = vadd.f32 0.0, %v1278
    %v1280 = vpop.f32.mrb[0].mxu0
    %v1281 = vadd.f32 0.0, %v1280
    %v1282 = vpop.f32.mrb[0].mxu0
    %v1283 = vpop.f32.mrb[0].mxu0
    %1284 = vdwg.mxu0
    %v1285 = vmul.f32 %v1279, %v1279
    %v1286 = vmul.f32 %v1281, %v1281
    %v1287 = vadd.f32 %v1285, %v1286
    %1288 = vadd.xlane.f32.xlu0 %v1287
    %v1289 = vpop.xlane.xlu0 %1288
    %v1290 = vadd.f32 %v1289, 1e-18
    %v1291 = vrsqrt.pop %v1290
    %v1292 = vmul.f32 %v1279, %v1291
    %v1293 = vmul.f32 %v1281, %v1291
    %v1294 = vmul.f32 %v1292, 0.25
    %v1295 = vmul.f32 %v1293, 0.25
    %v1296 = vadd.f32 %v1103, %v1294
    %v1297 = vadd.f32 %v1104, %v1295
    %v1298 = vsub.f32 %v1296, %v100
    %v1299 = vsub.f32 %v1297, %v101
    %v1300 = vmul.f32 %v1298, %v1298
    %v1301 = vmul.f32 %v1299, %v1299
    %v1302 = vadd.f32 %v1300, %v1301
    %1303 = vadd.xlane.f32.xlu0 %v1302
    %v1304 = vpop.xlane.xlu0 %1303
    %v1305 = vadd.f32 %v1304, 1e-18
    %v1306 = vrsqrt.pop %v1305
    %v1307 = vmul.f32 %v1298, %v1306
    %v1308 = vmul.f32 %v1299, %v1306
    %v1309 = vadd.f32 %v100, %v1307
    %v1310 = vadd.f32 %v101, %v1308
    %v1311 = vmax.f32 %v1309, 0.0
    %v1312 = vmax.f32 %v1310, 0.0
    %v1313 = vmin.f32 %v1311, 1.0
    %v1314 = vmin.f32 %v1312, 1.0
    %v1315 = vpack.c.bf16 %v1313, %v1313
    %v1316 = vpack.c.bf16 %v1314, %v1314
    %1317 = vmatprep.subr.bf16.mxu0 0
    %1318 = vmatpush1.bf16.msra.mxu0 %v263
    %1319 = vmatprep.subr.bf16.mxu0 0
    %1320 = vmatpush1.bf16.msra.mxu0 %v264
    %1321 = vmatprep.subr.bf16.mxu0 0
    %1322 = vmatpush1.bf16.msra.mxu0 %v265
    %1323 = vmatprep.subr.bf16.mxu0 0
    %1324 = vmatpush1.bf16.msra.mxu0 %v266
    %1325 = vmatprep.subr.bf16.mxu0 0
    %1326 = vmatpush1.bf16.msra.mxu0 %v267
    %1327 = vmatprep.subr.bf16.mxu0 0
    %1328 = vmatpush1.bf16.msra.mxu0 %v268
    %1329 = vmatprep.subr.bf16.mxu0 0
    %1330 = vmatpush1.bf16.msra.mxu0 %v269
    %1331 = vmatprep.subr.bf16.mxu0 0
    %1332 = vmatpush1.bf16.msra.mxu0 %v270
    %1333 = vmatprep.subr.bf16.mxu0 0
    %1334 = vmatpush1.bf16.msra.mxu0 %v271
    %1335 = vmatprep.subr.bf16.mxu0 0
    %1336 = vmatpush1.bf16.msra.mxu0 %v272
    %1337 = vmatprep.subr.bf16.mxu0 0
    %1338 = vmatpush1.bf16.msra.mxu0 %v273
    %1339 = vmatprep.subr.bf16.mxu0 0
    %1340 = vmatpush1.bf16.msra.mxu0 %v274
    %1341 = vmatprep.subr.bf16.mxu0 0
    %1342 = vmatpush1.bf16.msra.mxu0 %v275
    %1343 = vmatprep.subr.bf16.mxu0 0
    %1344 = vmatpush1.bf16.msra.mxu0 %v276
    %1345 = vmatprep.subr.bf16.mxu0 0
    %1346 = vmatpush1.bf16.msra.mxu0 %v277
    %1347 = vmatprep.subr.bf16.mxu0 0
    %1348 = vmatpush1.bf16.msra.mxu0 %v278
    %1349 = vmatprep.mubr.bf16.mxu0 %v1316
    %1350 = vmatmul.mubr.bf16.gmra.mrb[0].mxu0 %v1315
    %v1351 = vpop.f32.mrb[0].mxu0
    %v1352 = vadd.f32 %v197, %v1351
    %v1353 = vpop.f32.mrb[0].mxu0
    %v1354 = vpop.f32.mrb[0].mxu0
    %v1355 = vpop.f32.mrb[0].mxu0
    %1356 = vdwg.mxu0
    %v1357 = vmax.f32 %v1352, 0.0
    %v1358 = vpack.c.bf16 %v1357, %v1357
    %1359 = vmatprep.subr.bf16.mxu0 0
    %1360 = vmatpush1.bf16.msra.mxu0 %v375
    %1361 = vmatprep.subr.bf16.mxu0 0
    %1362 = vmatpush1.bf16.msra.mxu0 %v376
    %1363 = vmatprep.subr.bf16.mxu0 0
    %1364 = vmatpush1.bf16.msra.mxu0 %v377
    %1365 = vmatprep.subr.bf16.mxu0 0
    %1366 = vmatpush1.bf16.msra.mxu0 %v378
    %1367 = vmatprep.subr.bf16.mxu0 0
    %1368 = vmatpush1.bf16.msra.mxu0 %v379
    %1369 = vmatprep.subr.bf16.mxu0 0
    %1370 = vmatpush1.bf16.msra.mxu0 %v380
    %1371 = vmatprep.subr.bf16.mxu0 0
    %1372 = vmatpush1.bf16.msra.mxu0 %v381
    %1373 = vmatprep.subr.bf16.mxu0 0
    %1374 = vmatpush1.bf16.msra.mxu0 %v382
    %1375 = vmatprep.subr.bf16.mxu0 0
    %1376 = vmatpush1.bf16.msra.mxu0 0
    %1377 = vmatprep.subr.bf16.mxu0 0
    %1378 = vmatpush1.bf16.msra.mxu0 0
    %1379 = vmatprep.subr.bf16.mxu0 0
    %1380 = vmatpush1.bf16.msra.mxu0 0
    %1381 = vmatprep.subr.bf16.mxu0 0
    %1382 = vmatpush1.bf16.msra.mxu0 0
    %1383 = vmatprep.subr.bf16.mxu0 0
    %1384 = vmatpush1.bf16.msra.mxu0 0
    %1385 = vmatprep.subr.bf16.mxu0 0
    %1386 = vmatpush1.bf16.msra.mxu0 0
    %1387 = vmatprep.subr.bf16.mxu0 0
    %1388 = vmatpush1.bf16.msra.mxu0 0
    %1389 = vmatprep.subr.bf16.mxu0 0
    %1390 = vmatpush1.bf16.msra.mxu0 0
    %1391 = vmatprep.mubr.bf16.mxu0 0
    %1392 = vmatmul.mubr.bf16.gmra.mrb[0].mxu0 %v1358
    %v1393 = vpop.f32.mrb[0].mxu0
    %v1394 = vadd.f32 %v341, %v1393
    %v1395 = vpop.f32.mrb[0].mxu0
    %v1396 = vpop.f32.mrb[0].mxu0
    %v1397 = vpop.f32.mrb[0].mxu0
    %1398 = vdwg.mxu0
    %1399 = vmax.xlane.f32.xlu0 %v1394
    %v1400 = vpop.xlane.xlu0 %1399
    %v1401 = vsub.f32 %v1394, %v1400
    %v1402 = vmul.f32 %v1401, 1.442695
    %v1403 = vpow.pop %v1402
    %1404 = vadd.xlane.f32.xlu0 %v1403
    %v1405 = vpop.xlane.xlu0 %1404
    %v1406 = vrcp.pop %v1405
    %v1407 = vmul.f32 %v1403, %v1406
    %v1408 = vsub.f32 %v1407, 1.0
    %v1409 = vsel %vm190, %v1408, %v1407
    %v1410 = vpack.c.bf16 %v1409, %v1409
    %1411 = vmatprep.subr.bf16.mxu0 0
    %1412 = vmatpush1.bf16.msra.mxu0 %v475
    %1413 = vmatprep.subr.bf16.mxu0 0
    %1414 = vmatpush1.bf16.msra.mxu0 %v476
    %1415 = vmatprep.subr.bf16.mxu0 0
    %1416 = vmatpush1.bf16.msra.mxu0 %v477
    %1417 = vmatprep.subr.bf16.mxu0 0
    %1418 = vmatpush1.bf16.msra.mxu0 %v478
    %1419 = vmatprep.subr.bf16.mxu0 0
    %1420 = vmatpush1.bf16.msra.mxu0 %v479
    %1421 = vmatprep.subr.bf16.mxu0 0
    %1422 = vmatpush1.bf16.msra.mxu0 %v480
    %1423 = vmatprep.subr.bf16.mxu0 0
    %1424 = vmatpush1.bf16.msra.mxu0 %v481
    %1425 = vmatprep.subr.bf16.mxu0 0
    %1426 = vmatpush1.bf16.msra.mxu0 %v482
    %1427 = vmatprep.subr.bf16.mxu0 0
    %1428 = vmatpush1.bf16.msra.mxu0 0
    %1429 = vmatprep.subr.bf16.mxu0 0
    %1430 = vmatpush1.bf16.msra.mxu0 0
    %1431 = vmatprep.subr.bf16.mxu0 0
    %1432 = vmatpush1.bf16.msra.mxu0 0
    %1433 = vmatprep.subr.bf16.mxu0 0
    %1434 = vmatpush1.bf16.msra.mxu0 0
    %1435 = vmatprep.subr.bf16.mxu0 0
    %1436 = vmatpush1.bf16.msra.mxu0 0
    %1437 = vmatprep.subr.bf16.mxu0 0
    %1438 = vmatpush1.bf16.msra.mxu0 0
    %1439 = vmatprep.subr.bf16.mxu0 0
    %1440 = vmatpush1.bf16.msra.mxu0 0
    %1441 = vmatprep.subr.bf16.mxu0 0
    %1442 = vmatpush1.bf16.msra.mxu0 0
    %1443 = vmatprep.mubr.bf16.mxu0 0
    %1444 = vmatmul.mubr.bf16.gmra.mrb[0].mxu0 %v1410
    %v1445 = vpop.f32.mrb[0].mxu0
    %v1446 = vadd.f32 0.0, %v1445
    %v1447 = vpop.f32.mrb[0].mxu0
    %v1448 = vpop.f32.mrb[0].mxu0
    %v1449 = vpop.f32.mrb[0].mxu0
    %1450 = vdwg.mxu0
    %vm1451 = vcmp.gt.f32.partialorder %v1352, 0.0
    %v1452 = vsel %vm1451, %v1446, 0.0
    %v1453 = vpack.c.bf16 %v1452, %v1452
    %1454 = vmatprep.subr.bf16.mxu0 %v583
    %1455 = vmatpush1.bf16.msra.mxu0 %v582
    %1456 = vmatprep.subr.bf16.mxu0 %v585
    %1457 = vmatpush1.bf16.msra.mxu0 %v584
    %1458 = vmatprep.subr.bf16.mxu0 %v587
    %1459 = vmatpush1.bf16.msra.mxu0 %v586
    %1460 = vmatprep.subr.bf16.mxu0 %v589
    %1461 = vmatpush1.bf16.msra.mxu0 %v588
    %1462 = vmatprep.subr.bf16.mxu0 %v591
    %1463 = vmatpush1.bf16.msra.mxu0 %v590
    %1464 = vmatprep.subr.bf16.mxu0 %v593
    %1465 = vmatpush1.bf16.msra.mxu0 %v592
    %1466 = vmatprep.subr.bf16.mxu0 %v595
    %1467 = vmatpush1.bf16.msra.mxu0 %v594
    %1468 = vmatprep.subr.bf16.mxu0 %v597
    %1469 = vmatpush1.bf16.msra.mxu0 %v596
    %1470 = vmatprep.subr.bf16.mxu0 0
    %1471 = vmatpush1.bf16.msra.mxu0 0
    %1472 = vmatprep.subr.bf16.mxu0 0
    %1473 = vmatpush1.bf16.msra.mxu0 0
    %1474 = vmatprep.subr.bf16.mxu0 0
    %1475 = vmatpush1.bf16.msra.mxu0 0
    %1476 = vmatprep.subr.bf16.mxu0 0
    %1477 = vmatpush1.bf16.msra.mxu0 0
    %1478 = vmatprep.subr.bf16.mxu0 0
    %1479 = vmatpush1.bf16.msra.mxu0 0
    %1480 = vmatprep.subr.bf16.mxu0 0
    %1481 = vmatpush1.bf16.msra.mxu0 0
    %1482 = vmatprep.subr.bf16.mxu0 0
    %1483 = vmatpush1.bf16.msra.mxu0 0
    %1484 = vmatprep.subr.bf16.mxu0 0
    %1485 = vmatpush1.bf16.msra.mxu0 0
    %1486 = vmatprep.mubr.bf16.mxu0 0
    %1487 = vmatmul.mubr.bf16.gmra.mrb[0].mxu0 %v1453
    %v1488 = vpop.f32.mrb[0].mxu0
    %v1489 = vadd.f32 0.0, %v1488
    %v1490 = vpop.f32.mrb[0].mxu0
    %v1491 = vadd.f32 0.0, %v1490
    %v1492 = vpop.f32.mrb[0].mxu0
    %v1493 = vpop.f32.mrb[0].mxu0
    %1494 = vdwg.mxu0
    %v1495 = vmul.f32 %v1489, %v1489
    %v1496 = vmul.f32 %v1491, %v1491
    %v1497 = vadd.f32 %v1495, %v1496
    %1498 = vadd.xlane.f32.xlu0 %v1497
    %v1499 = vpop.xlane.xlu0 %1498
    %v1500 = vadd.f32 %v1499, 1e-18
    %v1501 = vrsqrt.pop %v1500
    %v1502 = vmul.f32 %v1489, %v1501
    %v1503 = vmul.f32 %v1491, %v1501
    %v1504 = vmul.f32 %v1502, 0.25
    %v1505 = vmul.f32 %v1503, 0.25
    %v1506 = vadd.f32 %v1313, %v1504
    %v1507 = vadd.f32 %v1314, %v1505
    %v1508 = vsub.f32 %v1506, %v100
    %v1509 = vsub.f32 %v1507, %v101
    %v1510 = vmul.f32 %v1508, %v1508
    %v1511 = vmul.f32 %v1509, %v1509
    %v1512 = vadd.f32 %v1510, %v1511
    %1513 = vadd.xlane.f32.xlu0 %v1512
    %v1514 = vpop.xlane.xlu0 %1513
    %v1515 = vadd.f32 %v1514, 1e-18
    %v1516 = vrsqrt.pop %v1515
    %v1517 = vmul.f32 %v1508, %v1516
    %v1518 = vmul.f32 %v1509, %v1516
    %v1519 = vadd.f32 %v100, %v1517
    %v1520 = vadd.f32 %v101, %v1518
    %v1521 = vmax.f32 %v1519, 0.0
    %v1522 = vmax.f32 %v1520, 0.0
    %v1523 = vmin.f32 %v1521, 1.0
    %v1524 = vmin.f32 %v1522, 1.0
    %v1525 = vpack.c.bf16 %v1523, %v1523
    %v1526 = vpack.c.bf16 %v1524, %v1524
    %1527 = vmatprep.subr.bf16.mxu0 0
    %1528 = vmatpush1.bf16.msra.mxu0 %v263
    %1529 = vmatprep.subr.bf16.mxu0 0
    %1530 = vmatpush1.bf16.msra.mxu0 %v264
    %1531 = vmatprep.subr.bf16.mxu0 0
    %1532 = vmatpush1.bf16.msra.mxu0 %v265
    %1533 = vmatprep.subr.bf16.mxu0 0
    %1534 = vmatpush1.bf16.msra.mxu0 %v266
    %1535 = vmatprep.subr.bf16.mxu0 0
    %1536 = vmatpush1.bf16.msra.mxu0 %v267
    %1537 = vmatprep.subr.bf16.mxu0 0
    %1538 = vmatpush1.bf16.msra.mxu0 %v268
    %1539 = vmatprep.subr.bf16.mxu0 0
    %1540 = vmatpush1.bf16.msra.mxu0 %v269
    %1541 = vmatprep.subr.bf16.mxu0 0
    %1542 = vmatpush1.bf16.msra.mxu0 %v270
    %1543 = vmatprep.subr.bf16.mxu0 0
    %1544 = vmatpush1.bf16.msra.mxu0 %v271
    %1545 = vmatprep.subr.bf16.mxu0 0
    %1546 = vmatpush1.bf16.msra.mxu0 %v272
    %1547 = vmatprep.subr.bf16.mxu0 0
    %1548 = vmatpush1.bf16.msra.mxu0 %v273
    %1549 = vmatprep.subr.bf16.mxu0 0
    %1550 = vmatpush1.bf16.msra.mxu0 %v274
    %1551 = vmatprep.subr.bf16.mxu0 0
    %1552 = vmatpush1.bf16.msra.mxu0 %v275
    %1553 = vmatprep.subr.bf16.mxu0 0
    %1554 = vmatpush1.bf16.msra.mxu0 %v276
    %1555 = vmatprep.subr.bf16.mxu0 0
    %1556 = vmatpush1.bf16.msra.mxu0 %v277
    %1557 = vmatprep.subr.bf16.mxu0 0
    %1558 = vmatpush1.bf16.msra.mxu0 %v278
    %1559 = vmatprep.mubr.bf16.mxu0 %v1526
    %1560 = vmatmul.mubr.bf16.gmra.mrb[0].mxu0 %v1525
    %v1561 = vpop.f32.mrb[0].mxu0
    %v1562 = vadd.f32 %v197, %v1561
    %v1563 = vpop.f32.mrb[0].mxu0
    %v1564 = vpop.f32.mrb[0].mxu0
    %v1565 = vpop.f32.mrb[0].mxu0
    %1566 = vdwg.mxu0
    %v1567 = vmax.f32 %v1562, 0.0
    %v1568 = vpack.c.bf16 %v1567, %v1567
    %1569 = vmatprep.subr.bf16.mxu0 0
    %1570 = vmatpush1.bf16.msra.mxu0 %v375
    %1571 = vmatprep.subr.bf16.mxu0 0
    %1572 = vmatpush1.bf16.msra.mxu0 %v376
    %1573 = vmatprep.subr.bf16.mxu0 0
    %1574 = vmatpush1.bf16.msra.mxu0 %v377
    %1575 = vmatprep.subr.bf16.mxu0 0
    %1576 = vmatpush1.bf16.msra.mxu0 %v378
    %1577 = vmatprep.subr.bf16.mxu0 0
    %1578 = vmatpush1.bf16.msra.mxu0 %v379
    %1579 = vmatprep.subr.bf16.mxu0 0
    %1580 = vmatpush1.bf16.msra.mxu0 %v380
    %1581 = vmatprep.subr.bf16.mxu0 0
    %1582 = vmatpush1.bf16.msra.mxu0 %v381
    %1583 = vmatprep.subr.bf16.mxu0 0
    %1584 = vmatpush1.bf16.msra.mxu0 %v382
    %1585 = vmatprep.subr.bf16.mxu0 0
    %1586 = vmatpush1.bf16.msra.mxu0 0
    %1587 = vmatprep.subr.bf16.mxu0 0
    %1588 = vmatpush1.bf16.msra.mxu0 0
    %1589 = vmatprep.subr.bf16.mxu0 0
    %1590 = vmatpush1.bf16.msra.mxu0 0
    %1591 = vmatprep.subr.bf16.mxu0 0
    %1592 = vmatpush1.bf16.msra.mxu0 0
    %1593 = vmatprep.subr.bf16.mxu0 0
    %1594 = vmatpush1.bf16.msra.mxu0 0
    %1595 = vmatprep.subr.bf16.mxu0 0
    %1596 = vmatpush1.bf16.msra.mxu0 0
    %1597 = vmatprep.subr.bf16.mxu0 0
    %1598 = vmatpush1.bf16.msra.mxu0 0
    %1599 = vmatprep.subr.bf16.mxu0 0
    %1600 = vmatpush1.bf16.msra.mxu0 0
    %1601 = vmatprep.mubr.bf16.mxu0 0
    %1602 = vmatmul.mubr.bf16.gmra.mrb[0].mxu0 %v1568
    %v1603 = vpop.f32.mrb[0].mxu0
    %v1604 = vadd.f32 %v341, %v1603
    %v1605 = vpop.f32.mrb[0].mxu0
    %v1606 = vpop.f32.mrb[0].mxu0
    %v1607 = vpop.f32.mrb[0].mxu0
    %1608 = vdwg.mxu0
    %1609 = vst [vmem:[#allocation11] sm:$0xff] %v1604
    %1610 = vst [vmem:[#allocation12] sm:$0xff] %v1523
    %1611 = vst [vmem:[#allocation12 + $0x8] sm:$0xff] %v1524
    // Predicated region
    $region54: #{tpu_custom_call.1} parent=1 // pred_check
      _
    $region55: #{tpu_custom_call.1} parent=1 // pred_check_branch
      %1613 = sbr.rel (0) target = $region57
    $region56: #{tpu_custom_call.1} parent=1 // pred_region
      %s1615 = ssub.s32 128, 128
      %1616 = vsyncadd [#allocation4], %s1615
      %s1618 = sshll.u32 [#allocation11], 4
      %s1619 = int_to_ptr.vmem [resolvable:$true] %s1618
      %1621 = dma.vmem_to_hbm [thread:$0]  %s1619, 128, %s8, [#allocation4]
    $region57: #{tpu_custom_call.1} parent=1 // pred_fallthru
      _
    // Predicated region
    $region58: #{tpu_custom_call.1} parent=1 // pred_check
      _
    $region59: #{tpu_custom_call.1} parent=1 // pred_check_branch
      %1623 = sbr.rel (0) target = $region61
    $region60: #{tpu_custom_call.1} parent=1 // pred_region
      %s1625 = ssub.s32 256, 256
      %1626 = vsyncadd [#allocation13], %s1625
      %s1628 = sshll.u32 [#allocation12], 4
      %s1629 = int_to_ptr.vmem [resolvable:$true] %s1628
      %1631 = dma.vmem_to_hbm [thread:$0]  %s1629, 256, %s9, [#allocation13]
    $region61: #{tpu_custom_call.1} parent=1 // pred_fallthru
      _
    // Predicated region
    $region62: #{tpu_custom_call.1} parent=1 // pred_check
      _
    $region63: #{tpu_custom_call.1} parent=1 // pred_check_branch
      %1633 = sbr.rel (0) target = $region65
    $region64: #{tpu_custom_call.1} parent=1 // pred_region
      %1634 = dma.done [#allocation4], 128
    $region65: #{tpu_custom_call.1} parent=1 // pred_fallthru
      _
    // Predicated region
    $region66: #{tpu_custom_call.1} parent=1 // pred_check
      _
    $region67: #{tpu_custom_call.1} parent=1 // pred_check_branch
      %1636 = sbr.rel (0) target = $region69
    $region68: #{tpu_custom_call.1} parent=1 // pred_region
      %1637 = dma.done [#allocation13], 256
    $region69: #{tpu_custom_call.1} parent=1 // pred_fallthru
      _
    %1638 = vsyncpa [#allocation3], 1
    %1639 = vsyncpa [#allocation6], 1
    %1640 = vsyncpa [#allocation9], 1
    %1641 = vsyncpa [#allocation4], 1
    %1642 = vsyncpa [#allocation13], 1

</llo_original>
